<compile_context>
chip_gen: v7x
topology: tpu7x:2x2x1
jax: 0.10.0
libtpu: 0.0.40
codegen_flags: <defaults>
</compile_context>

<pallas_src>
import jax
import jax.numpy as jnp
import numpy as np
from jax.experimental import pallas as pl
from jax.experimental.pallas import tpu as pltpu

BN_EPS = 1e-5


# ------------------------------- Pallas kernel ------------------------------ #

def _conv2plus1d_kernel(x_ref, wt_ref, b1_ref, ws_ref, b2_ref, o_ref):
    """Fused temporal-conv + BN1 + ReLU + spatial-conv + BN2 + ReLU for one batch.

    x_ref  : (1, T, H, W*Cin)    f32   lane-dense input slab for batch n
    wt_ref : (3, W*Cin, W*Cmid)  bf16  block-diagonal temporal weights (BN1 folded)
    b1_ref : (1, W*Cmid)         f32   BN1 bias tiled over W
    ws_ref : (3, W*Cmid, W*Cout) bf16  banded spatial weights (kw taps + W pad + BN2)
    b2_ref : (1, W*Cout)         f32   BN2 bias tiled over W
    o_ref  : (1, T, H, W*Cout)   f32   lane-dense output slab
    """
    T, H = x_ref.shape[1], x_ref.shape[2]
    TH = T * H

    x3 = x_ref[0].astype(jnp.bfloat16)                        # (T, H, W*Cin)
    t_idx = jax.lax.broadcasted_iota(jnp.int32, (T, H, 1), 0)
    h_idx = jax.lax.broadcasted_iota(jnp.int32, (T, H, 1), 1)

    def shift(a, k, axis, keep):
        # +-1 shift along `axis`; rows produced by the zero padding (and the
        # roll wrap-around) are masked to zero via `keep`.
        return jnp.where(keep, jnp.roll(a, k, axis=axis), jnp.zeros_like(a))

    def mm(a3, w):                                            # (T,H,K)@(K,N) -> (TH,N) f32
        return jnp.dot(a3.reshape(TH, a3.shape[2]), w,
                       preferred_element_type=jnp.float32)

    # ---------------- temporal (3,1,1) conv + BN1 + ReLU ----------------
    x_tm1 = shift(x3, 1, 0, t_idx > 0)                        # x[t-1], zero at t == 0
    x_tp1 = shift(x3, -1, 0, t_idx < T - 1)                   # x[t+1], zero at t == T-1
    acc = mm(x_tm1, wt_ref[0]) + mm(x3, wt_ref[1]) + mm(x_tp1, wt_ref[2])
    y = jnp.maximum(acc + b1_ref[...], 0.0)                   # (T*H, W*Cmid) f32

    # Dropout3d is identity at inference.

    # ---------------- spatial (1,3,3) conv + BN2 + ReLU -----------------
    # kw taps + W zero-padding are folded into the banded weights; kh taps are
    # +-1 row shifts along H with the H zero-padding expressed as masks.
    y3 = y.astype(jnp.bfloat16).reshape(T, H, y.shape[1])
    y_hm1 = shift(y3, 1, 1, h_idx > 0)                        # y[:, h-1]
    y_hp1 = shift(y3, -1, 1, h_idx < H - 1)                   # y[:, h+1]
    acc2 = mm(y_hm1, ws_ref[0]) + mm(y3, ws_ref[1]) + mm(y_hp1, ws_ref[2])
    z = jnp.maximum(acc2 + b2_ref[...], 0.0)                  # (T*H, W*Cout)
    o_ref[0] = z.reshape(T, H, z.shape[1])


# --------------------------- weight preprocessing --------------------------- #

def _fold_bn(gamma, beta, mean, var):
    scale = gamma / jnp.sqrt(var + BN_EPS)
    return scale.astype(jnp.float32), (beta - mean * scale).astype(jnp.float32)


def _block_diag(w, width):
    # w: (3, Cin, Cmid) -> (3, width*Cin, width*Cmid), block-diagonal over width.
    eye = jnp.eye(width, dtype=w.dtype)
    k, cin, cmid = w.shape
    return jnp.einsum("uv,kcd->kucvd", eye, w).reshape(k, width * cin, width * cmid)


def _banded(ws, width):
    # ws: (3, 3, Cmid, Cout) -> (3, width*Cmid, width*Cout)
    # band[kh][w_in*Cmid + c, w_out*Cout + d] = ws[kh, w_in - w_out + 1, c, d]
    # (zero outside kw in [0,3): this also implements zero padding along W).
    _, _, cmid, cout = ws.shape
    w_in = jnp.arange(width)[:, None]
    w_out = jnp.arange(width)[None, :]
    kw = w_in - w_out + 1
    valid = ((kw >= 0) & (kw < 3)).astype(ws.dtype)
    blocks = ws[:, jnp.clip(kw, 0, 2)] * valid[None, :, :, None, None]
    blocks = jnp.transpose(blocks, (0, 1, 3, 2, 4))           # (3, W, Cmid, W, Cout)
    return blocks.reshape(3, width * cmid, width * cout)


# ------------------------------ module forward ------------------------------ #

def conv2plus1d_forward(x_ncthw, params):
    """Conv2Plus1D forward for PyTorch NCDHW input (inference semantics)."""
    x = jnp.transpose(x_ncthw, (0, 2, 3, 4, 1)).astype(jnp.float32)  # (N,T,H,W,Cin)
    N, T, H, W, Cin = x.shape
    wt = params["wt"]                      # (3, Cin, Cmid)
    ws = params["ws"]                      # (3, 3, Cmid, Cout)
    Cmid, Cout = wt.shape[2], ws.shape[3]

    # Fold BN scale into conv weights; keep only the bias for the epilogue.
    wt_f = wt * params["s1"][None, None, :]
    ws_f = ws * params["s2"][None, None, None, :]
    wt_bd = _block_diag(wt_f, W).astype(jnp.bfloat16)         # (3, W*Cin,  W*Cmid)
    ws_bd = _banded(ws_f, W).astype(jnp.bfloat16)             # (3, W*Cmid, W*Cout)
    b1 = jnp.tile(params["b1"], W).reshape(1, W * Cmid).astype(jnp.float32)
    b2 = jnp.tile(params["b2"], W).reshape(1, W * Cout).astype(jnp.float32)

    x_rows = x.reshape(N, T, H, W * Cin)   # lane-dense activation layout

    out = pl.pallas_call(
        _conv2plus1d_kernel,
        out_shape=jax.ShapeDtypeStruct((N, T, H, W * Cout), jnp.float32),
        grid=(N,),
        in_specs=[
            pl.BlockSpec((1, T, H, W * Cin), lambda n: (n, 0, 0, 0)),
            pl.BlockSpec((3, W * Cin, W * Cmid), lambda n: (0, 0, 0)),
            pl.BlockSpec((1, W * Cmid), lambda n: (0, 0)),
            pl.BlockSpec((3, W * Cmid, W * Cout), lambda n: (0, 0, 0)),
            pl.BlockSpec((1, W * Cout), lambda n: (0, 0)),
        ],
        out_specs=pl.BlockSpec((1, T, H, W * Cout), lambda n: (n, 0, 0, 0)),
        compiler_params=pltpu.CompilerParams(
            dimension_semantics=("parallel",),
        ),
    )(x_rows, wt_bd, b1, ws_bd, b2)

    out = out.reshape(N, T, H, W, Cout)
    return jnp.transpose(out, (0, 4, 1, 2, 3))                # -> (N, Cout, T, H, W)


# ------------------------- deterministic parameters ------------------------- #

def _init_bn(key, c):
    k1, k2, k3, k4 = jax.random.split(key, 4)
    gamma = jax.random.uniform(k1, (c,), minval=0.5, maxval=1.5)
    beta = jax.random.normal(k2, (c,)) * 0.1
    mean = jax.random.normal(k3, (c,)) * 0.1
    var = jax.random.uniform(k4, (c,), minval=0.5, maxval=1.5)
    return _fold_bn(gamma, beta, mean, var)


def init_params(key, c_in, c_out):
    k1, k2, k3, k4 = jax.random.split(key, 4)
    c_mid = c_out
    wt = (jax.random.normal(k1, (3, c_in, c_mid)) / np.sqrt(3 * c_in)).astype(jnp.float32)
    ws = (jax.random.normal(k2, (3, 3, c_mid, c_out)) / np.sqrt(9 * c_mid)).astype(jnp.float32)
    s1, b1 = _init_bn(k3, c_mid)
    s2, b2 = _init_bn(k4, c_out)
    return dict(wt=wt, ws=ws, s1=s1, b1=b1, s2=s2, b2=b2)


# ------------------------------ pure-JAX reference --------------------------- #

def _ref_conv2plus1d(x_ncthw, p):
    x = jnp.transpose(x_ncthw, (0, 2, 3, 4, 1)).astype(jnp.float32)
    N, T, H, W, Cin = x.shape
    xp_ = jnp.pad(x, ((0, 0), (1, 1), (0, 0), (0, 0), (0, 0)))
    y = sum(jnp.einsum("nthwc,cd->nthwd", xp_[:, kt:kt + T], p["wt"][kt],
                       precision=jax.lax.Precision.HIGHEST) for kt in range(3))
    y = jnp.maximum(y * p["s1"] + p["b1"], 0.0)
    yp = jnp.pad(y, ((0, 0), (0, 0), (1, 1), (1, 1), (0, 0)))
    z = sum(jnp.einsum("nthwc,cd->nthwd", yp[:, :, kh:kh + H, kw:kw + W],
                       p["ws"][kh, kw], precision=jax.lax.Precision.HIGHEST)
            for kh in range(3) for kw in range(3))
    z = jnp.maximum(z * p["s2"] + p["b2"], 0.0)
    return jnp.transpose(z, (0, 4, 1, 2, 3))


# ----------------------------------- main ----------------------------------- #

if __name__ == "__main__":
    key = jax.random.PRNGKey(0)
    kx, kp = jax.random.split(key)

    N, Cin, Cout, T, H, W = 2, 16, 32, 8, 8, 8   # PyTorch NCDHW input
    x = jax.random.normal(kx, (N, Cin, T, H, W), dtype=jnp.float32)
    params = init_params(kp, Cin, Cout)

    out = jax.jit(conv2plus1d_forward)(x, params)
    out = jax.block_until_ready(out)

    assert out.shape == (N, Cout, T, H, W)
    ref = _ref_conv2plus1d(x, params)
    # bf16 MXU operands vs f32 HIGHEST reference -> a few-percent tolerance.
    np.testing.assert_allclose(np.asarray(out), np.asarray(ref),
                               rtol=3e-2, atol=3e-2)
    print("KERNEL_OK")
</pallas_src>

<mosaic_0001>
module attributes {stable_mosaic.version = 11 : i64} {
  func.func @_conv2plus1d_kernel(%arg0: i32, %arg1: memref<1x8x8x128xf32, #tpu.memory_space<vmem>>, %arg2: memref<3x128x256xbf16, #tpu.memory_space<vmem>>, %arg3: memref<1x256xf32, #tpu.memory_space<vmem>>, %arg4: memref<3x256x256xbf16, #tpu.memory_space<vmem>>, %arg5: memref<1x256xf32, #tpu.memory_space<vmem>>, %arg6: memref<1x8x8x256xf32, #tpu.memory_space<vmem>>) attributes {dimension_semantics = [#tpu.dimension_semantics<parallel>], iteration_bounds = array<i64: 2>, scalar_prefetch = 0 : i64, scratch_operands = 0 : i64, tpu.core_type = #tpu.core_type<tc>, window_params = [{transform_indices = @transform_0, window_bounds = array<i64: 1, 8, 8, 128>}, {pipeline_mode = #tpu.pipeline_mode<synchronous>, transform_indices = @transform_1, window_bounds = array<i64: 3, 128, 256>}, {pipeline_mode = #tpu.pipeline_mode<synchronous>, transform_indices = @transform_2, window_bounds = array<i64: 1, 256>}, {pipeline_mode = #tpu.pipeline_mode<synchronous>, transform_indices = @transform_3, window_bounds = array<i64: 3, 256, 256>}, {pipeline_mode = #tpu.pipeline_mode<synchronous>, transform_indices = @transform_4, window_bounds = array<i64: 1, 256>}, {transform_indices = @transform_5, window_bounds = array<i64: 1, 8, 8, 256>}]} {
    %c0 = arith.constant 0 : index
    %c0_0 = arith.constant 0 : index
    %c0_1 = arith.constant 0 : index
    %c0_2 = arith.constant 0 : index
    %0 = vector.load %arg1[%c0, %c0_0, %c0_1, %c0_2] : memref<1x8x8x128xf32, #tpu.memory_space<vmem>>, vector<1x8x8x128xf32>
    %1 = vector.shape_cast %0 : vector<1x8x8x128xf32> to vector<8x8x128xf32>
    %2 = arith.truncf %1 : vector<8x8x128xf32> to vector<8x8x128xbf16>
    %3 = tpu.iota {dimensions = array<i32: 0>} : vector<8x8x1xi32>
    %4 = tpu.iota {dimensions = array<i32: 1>} : vector<8x8x1xi32>
    %c0_i32 = arith.constant 0 : i32
    %5 = vector.broadcast %c0_i32 : i32 to vector<8x8x1xi32>
    %6 = arith.cmpi sgt, %3, %5 : vector<8x8x1xi32>
    %7 = vector.extract_strided_slice %2 {offsets = [7, 0, 0], sizes = [1, 8, 128], strides = [1, 1, 1]} : vector<8x8x128xbf16> to vector<1x8x128xbf16>
    %8 = vector.extract_strided_slice %2 {offsets = [0, 0, 0], sizes = [7, 8, 128], strides = [1, 1, 1]} : vector<8x8x128xbf16> to vector<7x8x128xbf16>
    %9 = tpu.concatenate %7, %8 in 0 : vector<1x8x128xbf16>, vector<7x8x128xbf16> -> vector<8x8x128xbf16>
    %cst = arith.constant 0.000000e+00 : bf16
    %10 = vector.broadcast %cst : bf16 to vector<8x8x128xbf16>
    %11 = vector.shape_cast %6 : vector<8x8x1xi1> to vector<8x8x1xi1>
    %12 = vector.broadcast %11 : vector<8x8x1xi1> to vector<8x8x128xi1>
    %13 = arith.select %12, %9, %10 : vector<8x8x128xi1>, vector<8x8x128xbf16>
    %c7_i32 = arith.constant 7 : i32
    %14 = vector.broadcast %c7_i32 : i32 to vector<8x8x1xi32>
    %15 = arith.cmpi slt, %3, %14 : vector<8x8x1xi32>
    %16 = vector.extract_strided_slice %2 {offsets = [1, 0, 0], sizes = [7, 8, 128], strides = [1, 1, 1]} : vector<8x8x128xbf16> to vector<7x8x128xbf16>
    %17 = vector.extract_strided_slice %2 {offsets = [0, 0, 0], sizes = [1, 8, 128], strides = [1, 1, 1]} : vector<8x8x128xbf16> to vector<1x8x128xbf16>
    %18 = tpu.concatenate %16, %17 in 0 : vector<7x8x128xbf16>, vector<1x8x128xbf16> -> vector<8x8x128xbf16>
    %cst_3 = arith.constant 0.000000e+00 : bf16
    %19 = vector.broadcast %cst_3 : bf16 to vector<8x8x128xbf16>
    %20 = vector.shape_cast %15 : vector<8x8x1xi1> to vector<8x8x1xi1>
    %21 = vector.broadcast %20 : vector<8x8x1xi1> to vector<8x8x128xi1>
    %22 = arith.select %21, %18, %19 : vector<8x8x128xi1>, vector<8x8x128xbf16>
    %c0_4 = arith.constant 0 : index
    %c0_5 = arith.constant 0 : index
    %c0_6 = arith.constant 0 : index
    %23 = vector.load %arg2[%c0_4, %c0_5, %c0_6] : memref<3x128x256xbf16, #tpu.memory_space<vmem>>, vector<1x128x256xbf16>
    %24 = vector.shape_cast %23 : vector<1x128x256xbf16> to vector<128x256xbf16>
    %25 = vector.shape_cast %13 : vector<8x8x128xbf16> to vector<64x128xbf16>
    %cst_7 = arith.constant dense<0.000000e+00> : vector<64x256xf32>
    %26 = tpu.matmul %25, %24, %cst_7 {dimension_numbers = #tpu.dot_dimension_numbers<[1], [0], [0], [1], [0, 0, 1, 1], [], []>} : vector<64x128xbf16>, vector<128x256xbf16>, vector<64x256xf32> -> vector<64x256xf32>
    %c1 = arith.constant 1 : index
    %c0_8 = arith.constant 0 : index
    %c0_9 = arith.constant 0 : index
    %27 = vector.load %arg2[%c1, %c0_8, %c0_9] : memref<3x128x256xbf16, #tpu.memory_space<vmem>>, vector<1x128x256xbf16>
    %28 = vector.shape_cast %27 : vector<1x128x256xbf16> to vector<128x256xbf16>
    %29 = vector.shape_cast %2 : vector<8x8x128xbf16> to vector<64x128xbf16>
    %cst_10 = arith.constant dense<0.000000e+00> : vector<64x256xf32>
    %30 = tpu.matmul %29, %28, %cst_10 {dimension_numbers = #tpu.dot_dimension_numbers<[1], [0], [0], [1], [0, 0, 1, 1], [], []>} : vector<64x128xbf16>, vector<128x256xbf16>, vector<64x256xf32> -> vector<64x256xf32>
    %31 = arith.addf %26, %30 : vector<64x256xf32>
    %c2 = arith.constant 2 : index
    %c0_11 = arith.constant 0 : index
    %c0_12 = arith.constant 0 : index
    %32 = vector.load %arg2[%c2, %c0_11, %c0_12] : memref<3x128x256xbf16, #tpu.memory_space<vmem>>, vector<1x128x256xbf16>
    %33 = vector.shape_cast %32 : vector<1x128x256xbf16> to vector<128x256xbf16>
    %34 = vector.shape_cast %22 : vector<8x8x128xbf16> to vector<64x128xbf16>
    %cst_13 = arith.constant dense<0.000000e+00> : vector<64x256xf32>
    %35 = tpu.matmul %34, %33, %cst_13 {dimension_numbers = #tpu.dot_dimension_numbers<[1], [0], [0], [1], [0, 0, 1, 1], [], []>} : vector<64x128xbf16>, vector<128x256xbf16>, vector<64x256xf32> -> vector<64x256xf32>
    %36 = arith.addf %31, %35 : vector<64x256xf32>
    %c0_14 = arith.constant 0 : index
    %c0_15 = arith.constant 0 : index
    %37 = vector.load %arg3[%c0_14, %c0_15] : memref<1x256xf32, #tpu.memory_space<vmem>>, vector<1x256xf32>
    %38 = vector.broadcast %37 : vector<1x256xf32> to vector<64x256xf32>
    %39 = arith.addf %36, %38 : vector<64x256xf32>
    %cst_16 = arith.constant 0.000000e+00 : f32
    %40 = vector.broadcast %cst_16 : f32 to vector<64x256xf32>
    %41 = arith.maximumf %39, %40 : vector<64x256xf32>
    %42 = arith.truncf %41 : vector<64x256xf32> to vector<64x256xbf16>
    %43 = vector.shape_cast %42 : vector<64x256xbf16> to vector<8x8x256xbf16>
    %c0_i32_17 = arith.constant 0 : i32
    %44 = vector.broadcast %c0_i32_17 : i32 to vector<8x8x1xi32>
    %45 = arith.cmpi sgt, %4, %44 : vector<8x8x1xi32>
    %46 = vector.extract_strided_slice %43 {offsets = [0, 7, 0], sizes = [8, 1, 256], strides = [1, 1, 1]} : vector<8x8x256xbf16> to vector<8x1x256xbf16>
    %47 = vector.extract_strided_slice %43 {offsets = [0, 0, 0], sizes = [8, 7, 256], strides = [1, 1, 1]} : vector<8x8x256xbf16> to vector<8x7x256xbf16>
    %48 = tpu.concatenate %46, %47 in 1 : vector<8x1x256xbf16>, vector<8x7x256xbf16> -> vector<8x8x256xbf16>
    %cst_18 = arith.constant 0.000000e+00 : bf16
    %49 = vector.broadcast %cst_18 : bf16 to vector<8x8x256xbf16>
    %50 = vector.shape_cast %45 : vector<8x8x1xi1> to vector<8x8x1xi1>
    %51 = vector.broadcast %50 : vector<8x8x1xi1> to vector<8x8x256xi1>
    %52 = arith.select %51, %48, %49 : vector<8x8x256xi1>, vector<8x8x256xbf16>
    %c7_i32_19 = arith.constant 7 : i32
    %53 = vector.broadcast %c7_i32_19 : i32 to vector<8x8x1xi32>
    %54 = arith.cmpi slt, %4, %53 : vector<8x8x1xi32>
    %55 = vector.extract_strided_slice %43 {offsets = [0, 1, 0], sizes = [8, 7, 256], strides = [1, 1, 1]} : vector<8x8x256xbf16> to vector<8x7x256xbf16>
    %56 = vector.extract_strided_slice %43 {offsets = [0, 0, 0], sizes = [8, 1, 256], strides = [1, 1, 1]} : vector<8x8x256xbf16> to vector<8x1x256xbf16>
    %57 = tpu.concatenate %55, %56 in 1 : vector<8x7x256xbf16>, vector<8x1x256xbf16> -> vector<8x8x256xbf16>
    %cst_20 = arith.constant 0.000000e+00 : bf16
    %58 = vector.broadcast %cst_20 : bf16 to vector<8x8x256xbf16>
    %59 = vector.shape_cast %54 : vector<8x8x1xi1> to vector<8x8x1xi1>
    %60 = vector.broadcast %59 : vector<8x8x1xi1> to vector<8x8x256xi1>
    %61 = arith.select %60, %57, %58 : vector<8x8x256xi1>, vector<8x8x256xbf16>
    %c0_21 = arith.constant 0 : index
    %c0_22 = arith.constant 0 : index
    %c0_23 = arith.constant 0 : index
    %62 = vector.load %arg4[%c0_21, %c0_22, %c0_23] : memref<3x256x256xbf16, #tpu.memory_space<vmem>>, vector<1x256x256xbf16>
    %63 = vector.shape_cast %62 : vector<1x256x256xbf16> to vector<256x256xbf16>
    %64 = vector.shape_cast %52 : vector<8x8x256xbf16> to vector<64x256xbf16>
    %cst_24 = arith.constant dense<0.000000e+00> : vector<64x256xf32>
    %65 = tpu.matmul %64, %63, %cst_24 {dimension_numbers = #tpu.dot_dimension_numbers<[1], [0], [0], [1], [0, 0, 1, 1], [], []>} : vector<64x256xbf16>, vector<256x256xbf16>, vector<64x256xf32> -> vector<64x256xf32>
    %c1_25 = arith.constant 1 : index
    %c0_26 = arith.constant 0 : index
    %c0_27 = arith.constant 0 : index
    %66 = vector.load %arg4[%c1_25, %c0_26, %c0_27] : memref<3x256x256xbf16, #tpu.memory_space<vmem>>, vector<1x256x256xbf16>
    %67 = vector.shape_cast %66 : vector<1x256x256xbf16> to vector<256x256xbf16>
    %68 = vector.shape_cast %43 : vector<8x8x256xbf16> to vector<64x256xbf16>
    %cst_28 = arith.constant dense<0.000000e+00> : vector<64x256xf32>
    %69 = tpu.matmul %68, %67, %cst_28 {dimension_numbers = #tpu.dot_dimension_numbers<[1], [0], [0], [1], [0, 0, 1, 1], [], []>} : vector<64x256xbf16>, vector<256x256xbf16>, vector<64x256xf32> -> vector<64x256xf32>
    %70 = arith.addf %65, %69 : vector<64x256xf32>
    %c2_29 = arith.constant 2 : index
    %c0_30 = arith.constant 0 : index
    %c0_31 = arith.constant 0 : index
    %71 = vector.load %arg4[%c2_29, %c0_30, %c0_31] : memref<3x256x256xbf16, #tpu.memory_space<vmem>>, vector<1x256x256xbf16>
    %72 = vector.shape_cast %71 : vector<1x256x256xbf16> to vector<256x256xbf16>
    %73 = vector.shape_cast %61 : vector<8x8x256xbf16> to vector<64x256xbf16>
    %cst_32 = arith.constant dense<0.000000e+00> : vector<64x256xf32>
    %74 = tpu.matmul %73, %72, %cst_32 {dimension_numbers = #tpu.dot_dimension_numbers<[1], [0], [0], [1], [0, 0, 1, 1], [], []>} : vector<64x256xbf16>, vector<256x256xbf16>, vector<64x256xf32> -> vector<64x256xf32>
    %75 = arith.addf %70, %74 : vector<64x256xf32>
    %c0_33 = arith.constant 0 : index
    %c0_34 = arith.constant 0 : index
    %76 = vector.load %arg5[%c0_33, %c0_34] : memref<1x256xf32, #tpu.memory_space<vmem>>, vector<1x256xf32>
    %77 = vector.broadcast %76 : vector<1x256xf32> to vector<64x256xf32>
    %78 = arith.addf %75, %77 : vector<64x256xf32>
    %cst_35 = arith.constant 0.000000e+00 : f32
    %79 = vector.broadcast %cst_35 : f32 to vector<64x256xf32>
    %80 = arith.maximumf %78, %79 : vector<64x256xf32>
    %81 = vector.shape_cast %80 : vector<64x256xf32> to vector<8x8x256xf32>
    %c0_36 = arith.constant 0 : index
    %c0_37 = arith.constant 0 : index
    %c0_38 = arith.constant 0 : index
    %c0_39 = arith.constant 0 : index
    %82 = vector.load %arg6[%c0_36, %c0_37, %c0_38, %c0_39] : memref<1x8x8x256xf32, #tpu.memory_space<vmem>>, vector<1x8x8x256xf32>
    %83 = vector.shape_cast %82 : vector<1x8x8x256xf32> to vector<8x8x256xf32>
    %84 = vector.shape_cast %81 : vector<8x8x256xf32> to vector<1x8x8x256xf32>
    tpu.vector_store %arg6[%c0_36, %c0_37, %c0_38, %c0_39], %84 {strides = array<i32>} : memref<1x8x8x256xf32, #tpu.memory_space<vmem>>, vector<1x8x8x256xf32>,
    return
  }
  func.func @transform_0(%arg0: i32) -> (i32, i32, i32, i32) {
    %c0_i32 = arith.constant 0 : i32
    %c0_i32_0 = arith.constant 0 : i32
    %c0_i32_1 = arith.constant 0 : i32
    %c0_i32_2 = arith.constant 0 : i32
    return %arg0, %c0_i32, %c0_i32_0, %c0_i32_1 : i32, i32, i32, i32
  }
  func.func @transform_1(%arg0: i32) -> (i32, i32, i32) {
    %c0_i32 = arith.constant 0 : i32
    %c0_i32_0 = arith.constant 0 : i32
    %c0_i32_1 = arith.constant 0 : i32
    %c0_i32_2 = arith.constant 0 : i32
    return %c0_i32, %c0_i32_0, %c0_i32_1 : i32, i32, i32
  }
  func.func @transform_2(%arg0: i32) -> (i32, i32) {
    %c0_i32 = arith.constant 0 : i32
    %c0_i32_0 = arith.constant 0 : i32
    %c0_i32_1 = arith.constant 0 : i32
    return %c0_i32, %c0_i32_0 : i32, i32
  }
  func.func @transform_3(%arg0: i32) -> (i32, i32, i32) {
    %c0_i32 = arith.constant 0 : i32
    %c0_i32_0 = arith.constant 0 : i32
    %c0_i32_1 = arith.constant 0 : i32
    %c0_i32_2 = arith.constant 0 : i32
    return %c0_i32, %c0_i32_0, %c0_i32_1 : i32, i32, i32
  }
  func.func @transform_4(%arg0: i32) -> (i32, i32) {
    %c0_i32 = arith.constant 0 : i32
    %c0_i32_0 = arith.constant 0 : i32
    %c0_i32_1 = arith.constant 0 : i32
    return %c0_i32, %c0_i32_0 : i32, i32
  }
  func.func @transform_5(%arg0: i32) -> (i32, i32, i32, i32) {
    %c0_i32 = arith.constant 0 : i32
    %c0_i32_0 = arith.constant 0 : i32
    %c0_i32_1 = arith.constant 0 : i32
    %c0_i32_2 = arith.constant 0 : i32
    return %arg0, %c0_i32, %c0_i32_0, %c0_i32_1 : i32, i32, i32, i32
  }
}

</mosaic_0001>

<llo_original>
// kernel: tile.13
$region0: #{tile.13}
  #allocation0 [shape = 's32[1]{0}', space=sflag, size = 0x4, scoped, tag = 'scoped memory for tile.13']
  %s0 = inlined_call_operand.vmem [shape: f32[32], index: 0, kind: input, shape index: {}]
  %s1 = inlined_call_operand.vmem [shape: f32[8,32], index: 1, kind: output, shape index: {}]
  // Predicated region
  $region2: #{tile.13} parent=0 // pred_check
    _
  $region3: #{tile.13} parent=0 // pred_check_branch
    %3 = sbr.rel (0) target = $region5
  $region4: #{tile.13} parent=0 // pred_region
    _
  $region5: #{tile.13} parent=0 // pred_fallthru
    _
  %v4 = vld [vmem:[%s0] ss:$0 sm:$0xff]
  %5 = vst [vmem:[%s1] sm:$0xff] %v4

// kernel: tile.14
$region0: #{tile.14}
  %s0 = inlined_call_operand.vmem [shape: f32[8,32], index: 0, kind: input, shape index: {}]
  %s1 = inlined_call_operand.vmem [shape: f32[1,256], index: 1, kind: output, shape index: {}]
  $region1: #{tile.14} parent=0
    #allocation0 [shape = 'u8[8192]{0}', space=vmem, size = 0x2000, scoped, tag = 'scoped mem for output reshape']
    %s2 = smov 3
    %v3 = vld [vmem:[%s0] ss:$4 sm:%s2]
    %vm4 = vcmask 261120
    %5 = vst.msk [vmem:[#allocation0] ss:$8 sm:$0x3] %vm4, %v3
    %s6 = scalar_lea.vmem %s0, 3
    %s7 = smov 3
    %v8 = vld [vmem:[%s6] ss:$4 sm:%s7]
    %9 = vrot.lane.b32.xlu0 %v8, 96
    %v10 = vpop.permute.xlu0 %9
    %vm11 = vcmask 1048320
    %12 = vst.msk [vmem:[#allocation0] ss:$8 sm:$0x3] %vm11, %v10
    %s13 = scalar_lea.vmem %s0, 2
    %s14 = smov 3
    %v15 = vld [vmem:[%s13] ss:$4 sm:%s14]
    %16 = vrot.lane.b32.xlu0 %v15, 64
    %v17 = vpop.permute.xlu0 %16
    %vm18 = vcmask 785920
    %19 = vst.msk [vmem:[#allocation0] ss:$8 sm:$0x3] %vm18, %v17
    %s20 = scalar_lea.vmem %s0, 1
    %s21 = smov 3
    %v22 = vld [vmem:[%s20] ss:$4 sm:%s21]
    %23 = vrot.lane.b32.xlu0 %v22, 32
    %v24 = vpop.permute.xlu0 %23
    %vm25 = vcmask 523520
    %26 = vst.msk [vmem:[#allocation0] ss:$8 sm:$0x3] %vm25, %v24
    %s28 = sshllo.u32 0, 1
    %v30 = vld [vmem:[#allocation0] sm:%s28]
    %s31 = sshllo.u32 0, 1
    %32 = vst [vmem:[%s1] sm:%s31] %v30
    %s33 = scalar_lea.vmem [#allocation0], 8
    %v34 = vld [vmem:[%s33] sm:%s28]
    %s35 = sshllo.u32 0, 1
    %s36 = scalar_lea.vmem %s1, 1
    %37 = vst [vmem:[%s36] sm:%s35] %v34

// kernel: conv2plus1d_forward.1
$region0: #{conv2plus1d_forward.1}
  #allocation0 [shape = 'u32[]', space=smem, size = 0x4, offset = 0x4, fixed_abs, tag = 'smem constant byte address 0x4 - core index']
  #allocation1 [shape = 'u32[144,128]{1,0:T(1,128)}', space=vmem, size = 0x12000, scoped, tag = 'internal scratch']
  %s0 = inlined_call_operand.vmem [shape: f32[2,8,8,128], index: 0, kind: input, shape index: {}]
  %s1 = inlined_call_operand.vmem [shape: bf16[3,128,256], index: 1, kind: input, shape index: {}]
  %s2 = inlined_call_operand.vmem [shape: f32[1,256], index: 2, kind: input, shape index: {}]
  %s3 = inlined_call_operand.vmem [shape: bf16[3,256,256], index: 3, kind: input, shape index: {}]
  %s4 = inlined_call_operand.vmem [shape: f32[1,256], index: 4, kind: input, shape index: {}]
  %s5 = inlined_call_operand.vmem [shape: f32[2,8,8,256], index: 5, kind: output, shape index: {}]
  %s6 = sld [smem:[#allocation0]]
  $region53: #{conv2plus1d_forward.1} parent=0
    _
  %s8 = ssub.s32 1, %s6
  %s9 = scalar_select 0, %s8, %s6
  loop: start=0, step=1, limit=4
  $region2: #{conv2plus1d_forward.1} parent=0 // loop_pre_header
    _
  $region3: #{conv2plus1d_forward.1} parent=0 // loop_header
    %s11 = sphi 0, %s15
    %p12 = scmp.ge.s32.totalorder %s11, 4
    %s21 = sphi 0, %s23
    %s24 = sphi 0, %s21
    %s25 = sphi 0, %s24
    %s41 = sphi 0, %s25
    %s45 = sphi 0, %s45
    %s47 = sphi 0, %s45
    %s48 = sphi 0, %s47
    %s62 = sphi 0, %s48
    %s66 = sphi 0, %s66
    %s68 = sphi 0, %s66
    %s69 = sphi 0, %s68
    %s83 = sphi 0, %s69
    %s87 = sphi 0, %s87
    %s89 = sphi 0, %s87
    %s90 = sphi 0, %s89
    %s104 = sphi 0, %s90
    %s108 = sphi 0, %s108
    %s110 = sphi 0, %s108
    %s111 = sphi 0, %s110
    %s125 = sphi 0, %s111
    %s131 = sphi 0, %s133
    %s134 = sphi 0, %s131
    %s135 = sphi 0, %s134
    %s151 = sphi 0, %s135
  $region4: #{conv2plus1d_forward.1} parent=0 // loop_header_branch
    %14 = sbr.rel (%p12) target = $region8
  $region5: #{conv2plus1d_forward.1} parent=0 // loop_body
    %s16 = ssub.s32 %s11, 1
    %s17 = ssub.s32 %s11, 2
    %s18 = sadd.s32 %s11, 1
    %s19 = ssub.s32 %s11, %s18
    %p20 = scmp.eq.s32.totalorder %s19, 0
    %s22 = sadd.s32 %s21, 1
    %s23 = scalar_select %p20, %s21, %s22
    %p26 = pneg %p20
    %p27 = scmp.eq.s32.totalorder %s11, 1
    %p28 = por %p26, %p27
    %p29 = scmp.ne.s32.totalorder %s21, %s24
    %p30 = scmp.eq.s32.totalorder %s11, 0
    %p31 = por %p29, %p30
    %p32 = scmp.ne.s32.totalorder %s21, %s24
    %p33 = scmp.eq.s32.totalorder %s16, 1
    %p34 = por %p32, %p33
    %p35 = scmp.ne.s32.totalorder %s24, %s25
    %p36 = scmp.eq.s32.totalorder %s16, 0
    %p37 = por %p35, %p36
    %p38 = scmp.ne.s32.totalorder %s24, %s25
    %p39 = scmp.eq.s32.totalorder %s17, 1
    %p40 = por %p38, %p39
    %p42 = scmp.ne.s32.totalorder %s25, %s41
    %p43 = scmp.eq.s32.totalorder %s17, 0
    %p44 = por %p42, %p43
    %s46 = sadd.s32 %s45, 1
    %p49 = scmp.eq.s32.totalorder %s11, 1
    %p50 = scmp.ne.s32.totalorder %s45, %s47
    %p51 = scmp.eq.s32.totalorder %s11, 0
    %p52 = por %p50, %p51
    %p53 = scmp.ne.s32.totalorder %s45, %s47
    %p54 = scmp.eq.s32.totalorder %s16, 1
    %p55 = por %p53, %p54
    %p56 = scmp.ne.s32.totalorder %s47, %s48
    %p57 = scmp.eq.s32.totalorder %s16, 0
    %p58 = por %p56, %p57
    %p59 = scmp.ne.s32.totalorder %s47, %s48
    %p60 = scmp.eq.s32.totalorder %s17, 1
    %p61 = por %p59, %p60
    %p63 = scmp.ne.s32.totalorder %s48, %s62
    %p64 = scmp.eq.s32.totalorder %s17, 0
    %p65 = por %p63, %p64
    %s67 = sadd.s32 %s66, 1
    %p70 = scmp.eq.s32.totalorder %s11, 1
    %p71 = scmp.ne.s32.totalorder %s66, %s68
    %p72 = scmp.eq.s32.totalorder %s11, 0
    %p73 = por %p71, %p72
    %p74 = scmp.ne.s32.totalorder %s66, %s68
    %p75 = scmp.eq.s32.totalorder %s16, 1
    %p76 = por %p74, %p75
    %p77 = scmp.ne.s32.totalorder %s68, %s69
    %p78 = scmp.eq.s32.totalorder %s16, 0
    %p79 = por %p77, %p78
    %p80 = scmp.ne.s32.totalorder %s68, %s69
    %p81 = scmp.eq.s32.totalorder %s17, 1
    %p82 = por %p80, %p81
    %p84 = scmp.ne.s32.totalorder %s69, %s83
    %p85 = scmp.eq.s32.totalorder %s17, 0
    %p86 = por %p84, %p85
    %s88 = sadd.s32 %s87, 1
    %p91 = scmp.eq.s32.totalorder %s11, 1
    %p92 = scmp.ne.s32.totalorder %s87, %s89
    %p93 = scmp.eq.s32.totalorder %s11, 0
    %p94 = por %p92, %p93
    %p95 = scmp.ne.s32.totalorder %s87, %s89
    %p96 = scmp.eq.s32.totalorder %s16, 1
    %p97 = por %p95, %p96
    %p98 = scmp.ne.s32.totalorder %s89, %s90
    %p99 = scmp.eq.s32.totalorder %s16, 0
    %p100 = por %p98, %p99
    %p101 = scmp.ne.s32.totalorder %s89, %s90
    %p102 = scmp.eq.s32.totalorder %s17, 1
    %p103 = por %p101, %p102
    %p105 = scmp.ne.s32.totalorder %s90, %s104
    %p106 = scmp.eq.s32.totalorder %s17, 0
    %p107 = por %p105, %p106
    %s109 = sadd.s32 %s108, 1
    %p112 = scmp.eq.s32.totalorder %s11, 1
    %p113 = scmp.ne.s32.totalorder %s108, %s110
    %p114 = scmp.eq.s32.totalorder %s11, 0
    %p115 = por %p113, %p114
    %p116 = scmp.ne.s32.totalorder %s108, %s110
    %p117 = scmp.eq.s32.totalorder %s16, 1
    %p118 = por %p116, %p117
    %p119 = scmp.ne.s32.totalorder %s110, %s111
    %p120 = scmp.eq.s32.totalorder %s16, 0
    %p121 = por %p119, %p120
    %p122 = scmp.ne.s32.totalorder %s110, %s111
    %p123 = scmp.eq.s32.totalorder %s17, 1
    %p124 = por %p122, %p123
    %p126 = scmp.ne.s32.totalorder %s111, %s125
    %p127 = scmp.eq.s32.totalorder %s17, 0
    %p128 = por %p126, %p127
    %s129 = ssub.s32 %s11, %s18
    %p130 = scmp.eq.s32.totalorder %s129, 0
    %s132 = sadd.s32 %s131, 1
    %s133 = scalar_select %p130, %s131, %s132
    %p136 = pneg %p130
    %p137 = scmp.eq.s32.totalorder %s11, 1
    %p138 = por %p136, %p137
    %p139 = scmp.ne.s32.totalorder %s131, %s134
    %p140 = scmp.eq.s32.totalorder %s11, 0
    %p141 = por %p139, %p140
    %p142 = scmp.ne.s32.totalorder %s131, %s134
    %p143 = scmp.eq.s32.totalorder %s16, 1
    %p144 = por %p142, %p143
    %p145 = scmp.ne.s32.totalorder %s134, %s135
    %p146 = scmp.eq.s32.totalorder %s16, 0
    %p147 = por %p145, %p146
    %p148 = scmp.ne.s32.totalorder %s134, %s135
    %p149 = scmp.eq.s32.totalorder %s17, 1
    %p150 = por %p148, %p149
    %p152 = scmp.ne.s32.totalorder %s135, %s151
    %p153 = scmp.eq.s32.totalorder %s17, 0
    %p154 = por %p152, %p153
    %p155 = scmp.le.s32.totalorder 1, %s11
    %p156 = scmp.lt.s32.totalorder %s11, 3
    %p157 = pnand %p155, %p156
    %p158 = pneg %p157
    // Predicated region
    $region9: #{conv2plus1d_forward.1} parent=5 // pred_check
      _
    $region10: #{conv2plus1d_forward.1} parent=5 // pred_check_branch
      %160 = sbr.rel (%p157) target = $region12
    $region11: #{conv2plus1d_forward.1} parent=5 // pred_region
      %s161 = ssub.s32 %s11, 1
      // Predicated region
      $region13: #{conv2plus1d_forward.1} parent=11 // pred_check
        %p162 = pneg %p58
      $region14: #{conv2plus1d_forward.1} parent=11 // pred_check_branch
        %164 = sbr.rel (%p162) target = $region16
      $region15: #{conv2plus1d_forward.1} parent=11 // pred_region
        _
      $region16: #{conv2plus1d_forward.1} parent=11 // pred_fallthru
        _
      // Predicated region
      $region17: #{conv2plus1d_forward.1} parent=11 // pred_check
        %p165 = pneg %p79
      $region18: #{conv2plus1d_forward.1} parent=11 // pred_check_branch
        %167 = sbr.rel (%p165) target = $region20
      $region19: #{conv2plus1d_forward.1} parent=11 // pred_region
        _
      $region20: #{conv2plus1d_forward.1} parent=11 // pred_fallthru
        _
      // Predicated region
      $region21: #{conv2plus1d_forward.1} parent=11 // pred_check
        %p168 = pneg %p100
      $region22: #{conv2plus1d_forward.1} parent=11 // pred_check_branch
        %170 = sbr.rel (%p168) target = $region24
      $region23: #{conv2plus1d_forward.1} parent=11 // pred_region
        _
      $region24: #{conv2plus1d_forward.1} parent=11 // pred_fallthru
        _
      // Predicated region
      $region25: #{conv2plus1d_forward.1} parent=11 // pred_check
        %p171 = pneg %p121
      $region26: #{conv2plus1d_forward.1} parent=11 // pred_check_branch
        %173 = sbr.rel (%p171) target = $region28
      $region27: #{conv2plus1d_forward.1} parent=11 // pred_region
        _
      $region28: #{conv2plus1d_forward.1} parent=11 // pred_fallthru
        _
    $region12: #{conv2plus1d_forward.1} parent=5 // pred_fallthru
      _
    %p174 = scmp.lt.s32.totalorder %s11, 2
    // Predicated region
    $region29: #{conv2plus1d_forward.1} parent=5 // pred_check
      %p175 = pneg %p174
    $region30: #{conv2plus1d_forward.1} parent=5 // pred_check_branch
      %177 = sbr.rel (%p175) target = $region32
    $region31: #{conv2plus1d_forward.1} parent=5 // pred_region
      // Predicated region
      $region33: #{conv2plus1d_forward.1} parent=31 // pred_check
        %p178 = pneg %p31
      $region34: #{conv2plus1d_forward.1} parent=31 // pred_check_branch
        %180 = sbr.rel (%p178) target = $region36
      $region35: #{conv2plus1d_forward.1} parent=31 // pred_region
        %p181 = scmp.lt.s32.totalorder %s11, 1
        %s182 = scalar_select %p181, %s11, 1
        %s183 = smul.addr %s182, 8
        %s184 = smul.addr %s183, 8
        %s185 = scalar_lea.vmem %s0, %s184
      $region36: #{conv2plus1d_forward.1} parent=31 // pred_fallthru
        _
    $region32: #{conv2plus1d_forward.1} parent=5 // pred_fallthru
      _
    %p186 = scmp.le.s32.totalorder 1, %s11
    %p187 = scmp.lt.s32.totalorder %s11, 3
    %p188 = pnand %p186, %p187
    %p189 = pneg %p188
    // Predicated region
    $region37: #{conv2plus1d_forward.1} parent=5 // pred_check
      _
    $region38: #{conv2plus1d_forward.1} parent=5 // pred_check_branch
      %191 = sbr.rel (%p188) target = $region40
    $region39: #{conv2plus1d_forward.1} parent=5 // pred_region
      %s192 = ssub.s32 %s11, 1
      %p193 = scmp.lt.s32.totalorder %s16, 1
      %s194 = scalar_select %p193, %s16, 1
      %s195 = smul.addr %s194, 8
      %s196 = smul.addr %s195, 8
      %s197 = scalar_lea.vmem %s0, %s196
      %p198 = pneg %p37
      %p199 = pneg %p34
      %p200 = pneg %p58
      %p201 = pneg %p55
      %p202 = pneg %p79
      %p203 = pneg %p76
      %p204 = pneg %p100
      %p205 = pneg %p97
      %p206 = pneg %p121
      %p207 = pneg %p118
      %p208 = pneg %p147
      %p209 = pneg %p144
      %p210 = scmp.lt.s32.totalorder %s16, 1
      %s211 = scalar_select %p210, %s16, 1
      %s212 = smul.addr %s211, 16
      %s213 = smul.addr %s212, 8
      %s214 = scalar_lea.vmem %s5, %s213
      %p215 = scmp.lt.s32.totalorder %s16, 1
      %s216 = scalar_select %p215, %s16, 1
      %s217 = smul.addr %s216, 8
      %s218 = smul.addr %s217, 8
      %s219 = scalar_lea.vmem %s0, %s218
      %p220 = scmp.lt.s32.totalorder %s16, 1
      %s221 = scalar_select %p220, %s16, 1
      %s222 = smul.addr %s221, 16
      %s223 = smul.addr %s222, 8
      %s224 = scalar_lea.vmem %s5, %s223
      %v228 = vld [vmem:[%s219] sm:$0xff]
      %v229 = vld [vmem:[%s219 + $0x8] sm:$0xff]
      %v230 = vld [vmem:[%s219 + $0x10] sm:$0xff]
      %v231 = vld [vmem:[%s219 + $0x18] sm:$0xff]
      %v232 = vld [vmem:[%s219 + $0x20] sm:$0xff]
      %v233 = vld [vmem:[%s219 + $0x28] sm:$0xff]
      %v234 = vld [vmem:[%s219 + $0x30] sm:$0xff]
      %v235 = vld [vmem:[%s219 + $0x38] sm:$0xff]
      %v236 = vpack.c.bf16 %v228, %v228
      %v237 = vpack.c.bf16 %v229, %v229
      %v238 = vpack.c.bf16 %v230, %v230
      %v239 = vpack.c.bf16 %v231, %v231
      %v240 = vpack.c.bf16 %v232, %v232
      %v241 = vpack.c.bf16 %v233, %v233
      %v242 = vpack.c.bf16 %v234, %v234
      %v243 = vpack.c.bf16 %v235, %v235
      %v244 = vlaneseq
      %v245 = vshrl.u32 %v244, 7
      %v246 = vsel 0, %v243, 0
      %v247 = vsel 1, %v236, 0
      %v248 = vsel 1, %v237, 0
      %v249 = vsel 1, %v238, 0
      %v250 = vsel 1, %v239, 0
      %v251 = vsel 1, %v240, 0
      %v252 = vsel 1, %v241, 0
      %v253 = vsel 1, %v242, 0
      %v254 = vsel 1, %v243, 0
      %v255 = vsel 0, %v236, 0
      %v256 = vld [vmem:[%s1] sm:$0xff]
      %v257 = vld [vmem:[%s1 + $0x8] sm:$0xff]
      %v258 = vld [vmem:[%s1 + $0x10] sm:$0xff]
      %v259 = vld [vmem:[%s1 + $0x18] sm:$0xff]
      %v260 = vld [vmem:[%s1 + $0x20] sm:$0xff]
      %v261 = vld [vmem:[%s1 + $0x28] sm:$0xff]
      %v262 = vld [vmem:[%s1 + $0x30] sm:$0xff]
      %v263 = vld [vmem:[%s1 + $0x38] sm:$0xff]
      %v264 = vld [vmem:[%s1 + $0x40] sm:$0xff]
      %v265 = vld [vmem:[%s1 + $0x48] sm:$0xff]
      %v266 = vld [vmem:[%s1 + $0x50] sm:$0xff]
      %v267 = vld [vmem:[%s1 + $0x58] sm:$0xff]
      %v268 = vld [vmem:[%s1 + $0x60] sm:$0xff]
      %v269 = vld [vmem:[%s1 + $0x68] sm:$0xff]
      %v270 = vld [vmem:[%s1 + $0x70] sm:$0xff]
      %v271 = vld [vmem:[%s1 + $0x78] sm:$0xff]
      %s272 = scalar_lea.vmem %s1, 128
      %v273 = vld [vmem:[%s272] sm:$0xff]
      %v274 = vld [vmem:[%s272 + $0x8] sm:$0xff]
      %v275 = vld [vmem:[%s272 + $0x10] sm:$0xff]
      %v276 = vld [vmem:[%s272 + $0x18] sm:$0xff]
      %v277 = vld [vmem:[%s272 + $0x20] sm:$0xff]
      %v278 = vld [vmem:[%s272 + $0x28] sm:$0xff]
      %v279 = vld [vmem:[%s272 + $0x30] sm:$0xff]
      %v280 = vld [vmem:[%s272 + $0x38] sm:$0xff]
      %v281 = vld [vmem:[%s272 + $0x40] sm:$0xff]
      %v282 = vld [vmem:[%s272 + $0x48] sm:$0xff]
      %v283 = vld [vmem:[%s272 + $0x50] sm:$0xff]
      %v284 = vld [vmem:[%s272 + $0x58] sm:$0xff]
      %v285 = vld [vmem:[%s272 + $0x60] sm:$0xff]
      %v286 = vld [vmem:[%s272 + $0x68] sm:$0xff]
      %v287 = vld [vmem:[%s272 + $0x70] sm:$0xff]
      %v288 = vld [vmem:[%s272 + $0x78] sm:$0xff]
      %v297 = vunpack.c.l.b16 %v236
      %v298 = vunpack.c.l.b16 %v237
      %v299 = vunpack.c.l.b16 %v238
      %v300 = vunpack.c.l.b16 %v239
      %v301 = vunpack.c.l.b16 %v240
      %v302 = vunpack.c.l.b16 %v241
      %v303 = vunpack.c.l.b16 %v242
      %v304 = vunpack.c.l.b16 %v243
      %v305 = vpack.c.b16 %v298, %v297
      %v306 = vpack.c.b16 %v300, %v299
      %v307 = vpack.c.b16 %v302, %v301
      %v308 = vpack.c.b16 %v304, %v303
      %v329 = vunpack.c.l.b16 %v273
      %v330 = vunpack.c.h.b16 %v273
      %v331 = vunpack.c.l.b16 %v274
      %v332 = vunpack.c.h.b16 %v274
      %v333 = vunpack.c.l.b16 %v275
      %v334 = vunpack.c.h.b16 %v275
      %v335 = vunpack.c.l.b16 %v276
      %v336 = vunpack.c.h.b16 %v276
      %v337 = vunpack.c.l.b16 %v277
      %v338 = vunpack.c.h.b16 %v277
      %v339 = vunpack.c.l.b16 %v278
      %v340 = vunpack.c.h.b16 %v278
      %v341 = vunpack.c.l.b16 %v279
      %v342 = vunpack.c.h.b16 %v279
      %v343 = vunpack.c.l.b16 %v280
      %v344 = vunpack.c.h.b16 %v280
      %v345 = vunpack.c.l.b16 %v281
      %v346 = vunpack.c.h.b16 %v281
      %v347 = vunpack.c.l.b16 %v282
      %v348 = vunpack.c.h.b16 %v282
      %v349 = vunpack.c.l.b16 %v283
      %v350 = vunpack.c.h.b16 %v283
      %v351 = vunpack.c.l.b16 %v284
      %v352 = vunpack.c.h.b16 %v284
      %v353 = vunpack.c.l.b16 %v285
      %v354 = vunpack.c.h.b16 %v285
      %v355 = vunpack.c.l.b16 %v286
      %v356 = vunpack.c.h.b16 %v286
      %v357 = vunpack.c.l.b16 %v287
      %v358 = vunpack.c.h.b16 %v287
      %v359 = vunpack.c.l.b16 %v288
      %v360 = vunpack.c.h.b16 %v288
      %v361 = vpack.c.b16 %v331, %v329
      %v362 = vpack.c.b16 %v332, %v330
      %v363 = vpack.c.b16 %v335, %v333
      %v364 = vpack.c.b16 %v336, %v334
      %v365 = vpack.c.b16 %v339, %v337
      %v366 = vpack.c.b16 %v340, %v338
      %v367 = vpack.c.b16 %v343, %v341
      %v368 = vpack.c.b16 %v344, %v342
      %v369 = vpack.c.b16 %v347, %v345
      %v370 = vpack.c.b16 %v348, %v346
      %v371 = vpack.c.b16 %v351, %v349
      %v372 = vpack.c.b16 %v352, %v350
      %v373 = vpack.c.b16 %v355, %v353
      %v374 = vpack.c.b16 %v356, %v354
      %v375 = vpack.c.b16 %v359, %v357
      %v376 = vpack.c.b16 %v360, %v358
      %393 = vmatprep.subr.bf16.mxu0 %v362
      %394 = vmatpush1.bf16.msra.mxu0 %v361
      %395 = vmatprep.subr.bf16.mxu0 %v364
      %396 = vmatpush1.bf16.msra.mxu0 %v363
      %397 = vmatprep.subr.bf16.mxu0 %v366
      %398 = vmatpush1.bf16.msra.mxu0 %v365
      %399 = vmatprep.subr.bf16.mxu0 %v368
      %400 = vmatpush1.bf16.msra.mxu0 %v367
      %401 = vmatprep.subr.bf16.mxu0 %v370
      %402 = vmatpush1.bf16.msra.mxu0 %v369
      %403 = vmatprep.subr.bf16.mxu0 %v372
      %404 = vmatpush1.bf16.msra.mxu0 %v371
      %405 = vmatprep.subr.bf16.mxu0 %v374
      %406 = vmatpush1.bf16.msra.mxu0 %v373
      %407 = vmatprep.subr.bf16.mxu0 %v376
      %408 = vmatpush1.bf16.msra.mxu0 %v375
      %409 = vmatprep.subr.bf16.mxu0 0
      %410 = vmatpush1.bf16.msra.mxu0 0
      %411 = vmatprep.subr.bf16.mxu0 0
      %412 = vmatpush1.bf16.msra.mxu0 0
      %413 = vmatprep.subr.bf16.mxu0 0
      %414 = vmatpush1.bf16.msra.mxu0 0
      %415 = vmatprep.subr.bf16.mxu0 0
      %416 = vmatpush1.bf16.msra.mxu0 0
      %417 = vmatprep.subr.bf16.mxu0 0
      %418 = vmatpush1.bf16.msra.mxu0 0
      %419 = vmatprep.subr.bf16.mxu0 0
      %420 = vmatpush1.bf16.msra.mxu0 0
      %421 = vmatprep.subr.bf16.mxu0 0
      %422 = vmatpush1.bf16.msra.mxu0 0
      %423 = vmatprep.subr.bf16.mxu0 0
      %424 = vmatpush1.bf16.msra.mxu0 0
      %425 = vmatprep.mubr.bf16.mxu0 0
      %426 = vmatmul.mubr.bf16.gmra.mrb[0].mxu0 %v305
      %v427 = vpop.f32.mrb[0].mxu0
      %v428 = vadd.f32 0.0, %v427
      %v429 = vpop.f32.mrb[0].mxu0
      %v430 = vadd.f32 0.0, %v429
      %v431 = vpop.f32.mrb[0].mxu0
      %v432 = vadd.f32 0.0, %v431
      %v433 = vpop.f32.mrb[0].mxu0
      %v434 = vadd.f32 0.0, %v433
      %435 = vmatprep.mubr.bf16.mxu0 0
      %436 = vmatmul.mubr.bf16.gmra.mrb[0].mxu0 %v306
      %v437 = vpop.f32.mrb[0].mxu0
      %v438 = vadd.f32 0.0, %v437
      %v439 = vpop.f32.mrb[0].mxu0
      %v440 = vadd.f32 0.0, %v439
      %v441 = vpop.f32.mrb[0].mxu0
      %v442 = vadd.f32 0.0, %v441
      %v443 = vpop.f32.mrb[0].mxu0
      %v444 = vadd.f32 0.0, %v443
      %445 = vmatprep.mubr.bf16.mxu0 0
      %446 = vmatmul.mubr.bf16.gmra.mrb[0].mxu0 %v307
      %v447 = vpop.f32.mrb[0].mxu0
      %v448 = vadd.f32 0.0, %v447
      %v449 = vpop.f32.mrb[0].mxu0
      %v450 = vadd.f32 0.0, %v449
      %v451 = vpop.f32.mrb[0].mxu0
      %v452 = vadd.f32 0.0, %v451
      %v453 = vpop.f32.mrb[0].mxu0
      %v454 = vadd.f32 0.0, %v453
      %455 = vmatprep.mubr.bf16.mxu0 0
      %456 = vmatmul.mubr.bf16.gmra.mrb[0].mxu0 %v308
      %v457 = vpop.f32.mrb[0].mxu0
      %v458 = vadd.f32 0.0, %v457
      %v459 = vpop.f32.mrb[0].mxu0
      %v460 = vadd.f32 0.0, %v459
      %v461 = vpop.f32.mrb[0].mxu0
      %v462 = vadd.f32 0.0, %v461
      %v463 = vpop.f32.mrb[0].mxu0
      %v464 = vadd.f32 0.0, %v463
      %465 = vdwg.mxu0
      %v474 = vunpack.c.l.b16 %v246
      %v475 = vunpack.c.l.b16 %v247
      %v476 = vunpack.c.l.b16 %v248
      %v477 = vunpack.c.l.b16 %v249
      %v478 = vunpack.c.l.b16 %v250
      %v479 = vunpack.c.l.b16 %v251
      %v480 = vunpack.c.l.b16 %v252
      %v481 = vunpack.c.l.b16 %v253
      %v482 = vpack.c.b16 %v475, %v474
      %v483 = vpack.c.b16 %v477, %v476
      %v484 = vpack.c.b16 %v479, %v478
      %v485 = vpack.c.b16 %v481, %v480
      %v506 = vunpack.c.l.b16 %v256
      %v507 = vunpack.c.h.b16 %v256
      %v508 = vunpack.c.l.b16 %v257
      %v509 = vunpack.c.h.b16 %v257
      %v510 = vunpack.c.l.b16 %v258
      %v511 = vunpack.c.h.b16 %v258
      %v512 = vunpack.c.l.b16 %v259
      %v513 = vunpack.c.h.b16 %v259
      %v514 = vunpack.c.l.b16 %v260
      %v515 = vunpack.c.h.b16 %v260
      %v516 = vunpack.c.l.b16 %v261
      %v517 = vunpack.c.h.b16 %v261
      %v518 = vunpack.c.l.b16 %v262
      %v519 = vunpack.c.h.b16 %v262
      %v520 = vunpack.c.l.b16 %v263
      %v521 = vunpack.c.h.b16 %v263
      %v522 = vunpack.c.l.b16 %v264
      %v523 = vunpack.c.h.b16 %v264
      %v524 = vunpack.c.l.b16 %v265
      %v525 = vunpack.c.h.b16 %v265
      %v526 = vunpack.c.l.b16 %v266
      %v527 = vunpack.c.h.b16 %v266
      %v528 = vunpack.c.l.b16 %v267
      %v529 = vunpack.c.h.b16 %v267
      %v530 = vunpack.c.l.b16 %v268
      %v531 = vunpack.c.h.b16 %v268
      %v532 = vunpack.c.l.b16 %v269
      %v533 = vunpack.c.h.b16 %v269
      %v534 = vunpack.c.l.b16 %v270
      %v535 = vunpack.c.h.b16 %v270
      %v536 = vunpack.c.l.b16 %v271
      %v537 = vunpack.c.h.b16 %v271
      %v538 = vpack.c.b16 %v508, %v506
      %v539 = vpack.c.b16 %v509, %v507
      %v540 = vpack.c.b16 %v512, %v510
      %v541 = vpack.c.b16 %v513, %v511
      %v542 = vpack.c.b16 %v516, %v514
      %v543 = vpack.c.b16 %v517, %v515
      %v544 = vpack.c.b16 %v520, %v518
      %v545 = vpack.c.b16 %v521, %v519
      %v546 = vpack.c.b16 %v524, %v522
      %v547 = vpack.c.b16 %v525, %v523
      %v548 = vpack.c.b16 %v528, %v526
      %v549 = vpack.c.b16 %v529, %v527
      %v550 = vpack.c.b16 %v532, %v530
      %v551 = vpack.c.b16 %v533, %v531
      %v552 = vpack.c.b16 %v536, %v534
      %v553 = vpack.c.b16 %v537, %v535
      %570 = vmatprep.subr.bf16.mxu0 %v539
      %571 = vmatpush1.bf16.msra.mxu0 %v538
      %572 = vmatprep.subr.bf16.mxu0 %v541
      %573 = vmatpush1.bf16.msra.mxu0 %v540
      %574 = vmatprep.subr.bf16.mxu0 %v543
      %575 = vmatpush1.bf16.msra.mxu0 %v542
      %576 = vmatprep.subr.bf16.mxu0 %v545
      %577 = vmatpush1.bf16.msra.mxu0 %v544
      %578 = vmatprep.subr.bf16.mxu0 %v547
      %579 = vmatpush1.bf16.msra.mxu0 %v546
      %580 = vmatprep.subr.bf16.mxu0 %v549
      %581 = vmatpush1.bf16.msra.mxu0 %v548
      %582 = vmatprep.subr.bf16.mxu0 %v551
      %583 = vmatpush1.bf16.msra.mxu0 %v550
      %584 = vmatprep.subr.bf16.mxu0 %v553
      %585 = vmatpush1.bf16.msra.mxu0 %v552
      %586 = vmatprep.subr.bf16.mxu0 0
      %587 = vmatpush1.bf16.msra.mxu0 0
      %588 = vmatprep.subr.bf16.mxu0 0
      %589 = vmatpush1.bf16.msra.mxu0 0
      %590 = vmatprep.subr.bf16.mxu0 0
      %591 = vmatpush1.bf16.msra.mxu0 0
      %592 = vmatprep.subr.bf16.mxu0 0
      %593 = vmatpush1.bf16.msra.mxu0 0
      %594 = vmatprep.subr.bf16.mxu0 0
      %595 = vmatpush1.bf16.msra.mxu0 0
      %596 = vmatprep.subr.bf16.mxu0 0
      %597 = vmatpush1.bf16.msra.mxu0 0
      %598 = vmatprep.subr.bf16.mxu0 0
      %599 = vmatpush1.bf16.msra.mxu0 0
      %600 = vmatprep.subr.bf16.mxu0 0
      %601 = vmatpush1.bf16.msra.mxu0 0
      %602 = vmatprep.mubr.bf16.mxu0 0
      %603 = vmatmul.mubr.bf16.gmra.mrb[0].mxu0 %v482
      %v604 = vpop.f32.mrb[0].mxu0
      %v605 = vadd.f32 %v428, %v604
      %v606 = vpop.f32.mrb[0].mxu0
      %v607 = vadd.f32 %v430, %v606
      %v608 = vpop.f32.mrb[0].mxu0
      %v609 = vadd.f32 %v432, %v608
      %v610 = vpop.f32.mrb[0].mxu0
      %v611 = vadd.f32 %v434, %v610
      %612 = vmatprep.mubr.bf16.mxu0 0
      %613 = vmatmul.mubr.bf16.gmra.mrb[0].mxu0 %v483
      %v614 = vpop.f32.mrb[0].mxu0
      %v615 = vadd.f32 %v438, %v614
      %v616 = vpop.f32.mrb[0].mxu0
      %v617 = vadd.f32 %v440, %v616
      %v618 = vpop.f32.mrb[0].mxu0
      %v619 = vadd.f32 %v442, %v618
      %v620 = vpop.f32.mrb[0].mxu0
      %v621 = vadd.f32 %v444, %v620
      %622 = vmatprep.mubr.bf16.mxu0 0
      %623 = vmatmul.mubr.bf16.gmra.mrb[0].mxu0 %v484
      %v624 = vpop.f32.mrb[0].mxu0
      %v625 = vadd.f32 %v448, %v624
      %v626 = vpop.f32.mrb[0].mxu0
      %v627 = vadd.f32 %v450, %v626
      %v628 = vpop.f32.mrb[0].mxu0
      %v629 = vadd.f32 %v452, %v628
      %v630 = vpop.f32.mrb[0].mxu0
      %v631 = vadd.f32 %v454, %v630
      %632 = vmatprep.mubr.bf16.mxu0 0
      %633 = vmatmul.mubr.bf16.gmra.mrb[0].mxu0 %v485
      %v634 = vpop.f32.mrb[0].mxu0
      %v635 = vadd.f32 %v458, %v634
      %v636 = vpop.f32.mrb[0].mxu0
      %v637 = vadd.f32 %v460, %v636
      %v638 = vpop.f32.mrb[0].mxu0
      %v639 = vadd.f32 %v462, %v638
      %v640 = vpop.f32.mrb[0].mxu0
      %v641 = vadd.f32 %v464, %v640
      %642 = vdwg.mxu0
      %s643 = scalar_lea.vmem %s1, 256
      %v644 = vld [vmem:[%s643] sm:$0xff]
      %v645 = vld [vmem:[%s643 + $0x8] sm:$0xff]
      %v646 = vld [vmem:[%s643 + $0x10] sm:$0xff]
      %v647 = vld [vmem:[%s643 + $0x18] sm:$0xff]
      %v648 = vld [vmem:[%s643 + $0x20] sm:$0xff]
      %v649 = vld [vmem:[%s643 + $0x28] sm:$0xff]
      %v650 = vld [vmem:[%s643 + $0x30] sm:$0xff]
      %v651 = vld [vmem:[%s643 + $0x38] sm:$0xff]
      %v652 = vld [vmem:[%s643 + $0x40] sm:$0xff]
      %v653 = vld [vmem:[%s643 + $0x48] sm:$0xff]
      %v654 = vld [vmem:[%s643 + $0x50] sm:$0xff]
      %v655 = vld [vmem:[%s643 + $0x58] sm:$0xff]
      %v656 = vld [vmem:[%s643 + $0x60] sm:$0xff]
      %v657 = vld [vmem:[%s643 + $0x68] sm:$0xff]
      %v658 = vld [vmem:[%s643 + $0x70] sm:$0xff]
      %v659 = vld [vmem:[%s643 + $0x78] sm:$0xff]
      %v662 = vunpack.c.l.b16 %v254
      %v663 = vunpack.c.l.b16 %v255
      %v664 = vpack.c.b16 %v663, %v662
      %v682 = vunpack.c.l.b16 %v644
      %v683 = vunpack.c.h.b16 %v644
      %v684 = vunpack.c.l.b16 %v645
      %v685 = vunpack.c.h.b16 %v645
      %v686 = vunpack.c.l.b16 %v646
      %v687 = vunpack.c.h.b16 %v646
      %v688 = vunpack.c.l.b16 %v647
      %v689 = vunpack.c.h.b16 %v647
      %v690 = vunpack.c.l.b16 %v648
      %v691 = vunpack.c.h.b16 %v648
      %v692 = vunpack.c.l.b16 %v649
      %v693 = vunpack.c.h.b16 %v649
      %v694 = vunpack.c.l.b16 %v650
      %v695 = vunpack.c.h.b16 %v650
      %v696 = vunpack.c.l.b16 %v651
      %v697 = vunpack.c.h.b16 %v651
      %v698 = vunpack.c.l.b16 %v652
      %v699 = vunpack.c.h.b16 %v652
      %v700 = vunpack.c.l.b16 %v653
      %v701 = vunpack.c.h.b16 %v653
      %v702 = vunpack.c.l.b16 %v654
      %v703 = vunpack.c.h.b16 %v654
      %v704 = vunpack.c.l.b16 %v655
      %v705 = vunpack.c.h.b16 %v655
      %v706 = vunpack.c.l.b16 %v656
      %v707 = vunpack.c.h.b16 %v656
      %v708 = vunpack.c.l.b16 %v657
      %v709 = vunpack.c.h.b16 %v657
      %v710 = vunpack.c.l.b16 %v658
      %v711 = vunpack.c.h.b16 %v658
      %v712 = vunpack.c.l.b16 %v659
      %v713 = vunpack.c.h.b16 %v659
      %v714 = vpack.c.b16 %v684, %v682
      %v715 = vpack.c.b16 %v685, %v683
      %v716 = vpack.c.b16 %v688, %v686
      %v717 = vpack.c.b16 %v689, %v687
      %v718 = vpack.c.b16 %v692, %v690
      %v719 = vpack.c.b16 %v693, %v691
      %v720 = vpack.c.b16 %v696, %v694
      %v721 = vpack.c.b16 %v697, %v695
      %v722 = vpack.c.b16 %v700, %v698
      %v723 = vpack.c.b16 %v701, %v699
      %v724 = vpack.c.b16 %v704, %v702
      %v725 = vpack.c.b16 %v705, %v703
      %v726 = vpack.c.b16 %v708, %v706
      %v727 = vpack.c.b16 %v709, %v707
      %v728 = vpack.c.b16 %v712, %v710
      %v729 = vpack.c.b16 %v713, %v711
      %746 = vmatprep.subr.bf16.mxu0 %v715
      %747 = vmatpush1.bf16.msra.mxu0 %v714
      %748 = vmatprep.subr.bf16.mxu0 %v717
      %749 = vmatpush1.bf16.msra.mxu0 %v716
      %750 = vmatprep.subr.bf16.mxu0 %v719
      %751 = vmatpush1.bf16.msra.mxu0 %v718
      %752 = vmatprep.subr.bf16.mxu0 %v721
      %753 = vmatpush1.bf16.msra.mxu0 %v720
      %754 = vmatprep.subr.bf16.mxu0 %v723
      %755 = vmatpush1.bf16.msra.mxu0 %v722
      %756 = vmatprep.subr.bf16.mxu0 %v725
      %757 = vmatpush1.bf16.msra.mxu0 %v724
      %758 = vmatprep.subr.bf16.mxu0 %v727
      %759 = vmatpush1.bf16.msra.mxu0 %v726
      %760 = vmatprep.subr.bf16.mxu0 %v729
      %761 = vmatpush1.bf16.msra.mxu0 %v728
      %762 = vmatprep.subr.bf16.mxu0 0
      %763 = vmatpush1.bf16.msra.mxu0 0
      %764 = vmatprep.subr.bf16.mxu0 0
      %765 = vmatpush1.bf16.msra.mxu0 0
      %766 = vmatprep.subr.bf16.mxu0 0
      %767 = vmatpush1.bf16.msra.mxu0 0
      %768 = vmatprep.subr.bf16.mxu0 0
      %769 = vmatpush1.bf16.msra.mxu0 0
      %770 = vmatprep.subr.bf16.mxu0 0
      %771 = vmatpush1.bf16.msra.mxu0 0
      %772 = vmatprep.subr.bf16.mxu0 0
      %773 = vmatpush1.bf16.msra.mxu0 0
      %774 = vmatprep.subr.bf16.mxu0 0
      %775 = vmatpush1.bf16.msra.mxu0 0
      %776 = vmatprep.subr.bf16.mxu0 0
      %777 = vmatpush1.bf16.msra.mxu0 0
      %778 = vmatprep.mubr.bf16.mxu0 0
      %779 = vmatmul.mubr.bf16.gmra.mrb[0].mxu0 %v483
      %v780 = vpop.f32.mrb[0].mxu0
      %v781 = vadd.f32 0.0, %v780
      %v782 = vpop.f32.mrb[0].mxu0
      %v783 = vadd.f32 0.0, %v782
      %v784 = vpop.f32.mrb[0].mxu0
      %v785 = vadd.f32 0.0, %v784
      %v786 = vpop.f32.mrb[0].mxu0
      %v787 = vadd.f32 0.0, %v786
      %788 = vmatprep.mubr.bf16.mxu0 0
      %789 = vmatmul.mubr.bf16.gmra.mrb[0].mxu0 %v484
      %v790 = vpop.f32.mrb[0].mxu0
      %v791 = vadd.f32 0.0, %v790
      %v792 = vpop.f32.mrb[0].mxu0
      %v793 = vadd.f32 0.0, %v792
      %v794 = vpop.f32.mrb[0].mxu0
      %v795 = vadd.f32 0.0, %v794
      %v796 = vpop.f32.mrb[0].mxu0
      %v797 = vadd.f32 0.0, %v796
      %798 = vmatprep.mubr.bf16.mxu0 0
      %799 = vmatmul.mubr.bf16.gmra.mrb[0].mxu0 %v485
      %v800 = vpop.f32.mrb[0].mxu0
      %v801 = vadd.f32 0.0, %v800
      %v802 = vpop.f32.mrb[0].mxu0
      %v803 = vadd.f32 0.0, %v802
      %v804 = vpop.f32.mrb[0].mxu0
      %v805 = vadd.f32 0.0, %v804
      %v806 = vpop.f32.mrb[0].mxu0
      %v807 = vadd.f32 0.0, %v806
      %808 = vmatprep.mubr.bf16.mxu0 0
      %809 = vmatmul.mubr.bf16.gmra.mrb[0].mxu0 %v664
      %v810 = vpop.f32.mrb[0].mxu0
      %v811 = vadd.f32 0.0, %v810
      %v812 = vpop.f32.mrb[0].mxu0
      %v813 = vadd.f32 0.0, %v812
      %v814 = vpop.f32.mrb[0].mxu0
      %v815 = vadd.f32 0.0, %v814
      %v816 = vpop.f32.mrb[0].mxu0
      %v817 = vadd.f32 0.0, %v816
      %818 = vdwg.mxu0
      %v819 = vadd.f32 %v605, %v781
      %v820 = vadd.f32 %v607, %v783
      %v821 = vadd.f32 %v609, %v785
      %v822 = vadd.f32 %v611, %v787
      %v823 = vadd.f32 %v615, %v791
      %v824 = vadd.f32 %v617, %v793
      %v825 = vadd.f32 %v619, %v795
      %v826 = vadd.f32 %v621, %v797
      %v827 = vadd.f32 %v625, %v801
      %v828 = vadd.f32 %v627, %v803
      %v829 = vadd.f32 %v629, %v805
      %v830 = vadd.f32 %v631, %v807
      %v831 = vadd.f32 %v635, %v811
      %v832 = vadd.f32 %v637, %v813
      %v833 = vadd.f32 %v639, %v815
      %v834 = vadd.f32 %v641, %v817
      %v835 = vld [vmem:[%s2] sm:$0x3]
      %v837 = vlaneseq
      %v838 = vshrl.u32 %v837, 7
      %v839 = vsub.s32 0, %v838
      %v840 = vrot.slane %v835, %v839
      %v841 = vlaneseq
      %v842 = vshrl.u32 %v841, 7
      %v843 = vsub.s32 1, %v842
      %v844 = vrot.slane %v835, %v843
      %v847 = vadd.f32 %v819, %v840
      %v848 = vadd.f32 %v820, %v844
      %v849 = vadd.f32 %v821, %v840
      %v850 = vadd.f32 %v822, %v844
      %v851 = vadd.f32 %v823, %v840
      %v852 = vadd.f32 %v824, %v844
      %v853 = vadd.f32 %v825, %v840
      %v854 = vadd.f32 %v826, %v844
      %v855 = vadd.f32 %v827, %v840
      %v856 = vadd.f32 %v828, %v844
      %v857 = vadd.f32 %v829, %v840
      %v858 = vadd.f32 %v830, %v844
      %v859 = vadd.f32 %v831, %v840
      %v860 = vadd.f32 %v832, %v844
      %v861 = vadd.f32 %v833, %v840
      %v862 = vadd.f32 %v834, %v844
      %v863 = vmax.f32 %v847, 0.0
      %v864 = vmax.f32 %v848, 0.0
      %v865 = vmax.f32 %v849, 0.0
      %v866 = vmax.f32 %v850, 0.0
      %v867 = vmax.f32 %v851, 0.0
      %v868 = vmax.f32 %v852, 0.0
      %v869 = vmax.f32 %v853, 0.0
      %v870 = vmax.f32 %v854, 0.0
      %v871 = vmax.f32 %v855, 0.0
      %v872 = vmax.f32 %v856, 0.0
      %v873 = vmax.f32 %v857, 0.0
      %v874 = vmax.f32 %v858, 0.0
      %v875 = vmax.f32 %v859, 0.0
      %v876 = vmax.f32 %v860, 0.0
      %v877 = vmax.f32 %v861, 0.0
      %v878 = vmax.f32 %v862, 0.0
      %v879 = vpack.c.bf16 %v865, %v863
      %v880 = vpack.c.bf16 %v866, %v864
      %v881 = vpack.c.bf16 %v869, %v867
      %v882 = vpack.c.bf16 %v870, %v868
      %v883 = vpack.c.bf16 %v873, %v871
      %v884 = vpack.c.bf16 %v874, %v872
      %v885 = vpack.c.bf16 %v877, %v875
      %v886 = vpack.c.bf16 %v878, %v876
      %v895 = vunpack.c.l.b16 %v879
      %v896 = vunpack.c.l.b16 %v880
      %v897 = vunpack.c.h.b16 %v879
      %v898 = vunpack.c.h.b16 %v880
      %v899 = vunpack.c.l.b16 %v881
      %v900 = vunpack.c.l.b16 %v882
      %v901 = vunpack.c.h.b16 %v881
      %v902 = vunpack.c.h.b16 %v882
      %v903 = vunpack.c.l.b16 %v883
      %v904 = vunpack.c.l.b16 %v884
      %v905 = vunpack.c.h.b16 %v883
      %v906 = vunpack.c.h.b16 %v884
      %v907 = vunpack.c.l.b16 %v885
      %v908 = vunpack.c.l.b16 %v886
      %v909 = vunpack.c.h.b16 %v885
      %v910 = vunpack.c.h.b16 %v886
      %vm911 = vcmp.gt.s32.totalorder %v245, 0
      %v912 = vpack.c.b16 %v895, %v895
      %v913 = vpack.c.b16 %v896, %v896
      %v914 = vpack.c.b16 %v897, %v897
      %v915 = vpack.c.b16 %v898, %v898
      %v916 = vpack.c.b16 %v899, %v899
      %v917 = vpack.c.b16 %v900, %v900
      %v918 = vpack.c.b16 %v901, %v901
      %v919 = vpack.c.b16 %v902, %v902
      %v920 = vpack.c.b16 %v903, %v903
      %v921 = vpack.c.b16 %v904, %v904
      %v922 = vpack.c.b16 %v905, %v905
      %v923 = vpack.c.b16 %v906, %v906
      %v924 = vpack.c.b16 %v907, %v907
      %v925 = vpack.c.b16 %v908, %v908
      %v926 = vpack.c.b16 %v909, %v909
      %v927 = vpack.c.b16 %v910, %v910
      %v929 = vshrl.u32 %v912, 16
      %v931 = vrot.slane %v929, 3
      %v933 = vshrl.u32 %v913, 16
      %v935 = vrot.slane %v933, 3
      %v937 = vshrl.u32 %v914, 16
      %v939 = vrot.slane %v937, 3
      %v941 = vshrl.u32 %v915, 16
      %v943 = vrot.slane %v941, 3
      %v945 = vshrl.u32 %v916, 16
      %v947 = vrot.slane %v945, 3
      %v949 = vshrl.u32 %v917, 16
      %v951 = vrot.slane %v949, 3
      %v953 = vshrl.u32 %v918, 16
      %v955 = vrot.slane %v953, 3
      %v957 = vshrl.u32 %v919, 16
      %v959 = vrot.slane %v957, 3
      %v961 = vshrl.u32 %v920, 16
      %v963 = vrot.slane %v961, 3
      %v965 = vshrl.u32 %v921, 16
      %v967 = vrot.slane %v965, 3
      %v969 = vshrl.u32 %v922, 16
      %v971 = vrot.slane %v969, 3
      %v973 = vshrl.u32 %v923, 16
      %v975 = vrot.slane %v973, 3
      %v977 = vshrl.u32 %v924, 16
      %v979 = vrot.slane %v977, 3
      %v981 = vshrl.u32 %v925, 16
      %v983 = vrot.slane %v981, 3
      %v985 = vshrl.u32 %v926, 16
      %v987 = vrot.slane %v985, 3
      %v989 = vshrl.u32 %v927, 16
      %v991 = vrot.slane %v989, 3
      %v1008 = vrot.slane %v929, 7
      %v1009 = vshll.u32 %v912, 16
      %v1011 = vor.u32 %v1008, %v1009
      %v1012 = vrot.slane %v933, 7
      %v1013 = vshll.u32 %v913, 16
      %v1015 = vor.u32 %v1012, %v1013
      %v1016 = vrot.slane %v937, 7
      %v1017 = vshll.u32 %v914, 16
      %v1019 = vor.u32 %v1016, %v1017
      %v1020 = vrot.slane %v941, 7
      %v1021 = vshll.u32 %v915, 16
      %v1023 = vor.u32 %v1020, %v1021
      %v1024 = vrot.slane %v945, 7
      %v1025 = vshll.u32 %v916, 16
      %v1027 = vor.u32 %v1024, %v1025
      %v1028 = vrot.slane %v949, 7
      %v1029 = vshll.u32 %v917, 16
      %v1031 = vor.u32 %v1028, %v1029
      %v1032 = vrot.slane %v953, 7
      %v1033 = vshll.u32 %v918, 16
      %v1035 = vor.u32 %v1032, %v1033
      %v1036 = vrot.slane %v957, 7
      %v1037 = vshll.u32 %v919, 16
      %v1039 = vor.u32 %v1036, %v1037
      %v1040 = vrot.slane %v961, 7
      %v1041 = vshll.u32 %v920, 16
      %v1043 = vor.u32 %v1040, %v1041
      %v1044 = vrot.slane %v965, 7
      %v1045 = vshll.u32 %v921, 16
      %v1047 = vor.u32 %v1044, %v1045
      %v1048 = vrot.slane %v969, 7
      %v1049 = vshll.u32 %v922, 16
      %v1051 = vor.u32 %v1048, %v1049
      %v1052 = vrot.slane %v973, 7
      %v1053 = vshll.u32 %v923, 16
      %v1055 = vor.u32 %v1052, %v1053
      %v1056 = vrot.slane %v977, 7
      %v1057 = vshll.u32 %v924, 16
      %v1059 = vor.u32 %v1056, %v1057
      %v1060 = vrot.slane %v981, 7
      %v1061 = vshll.u32 %v925, 16
      %v1063 = vor.u32 %v1060, %v1061
      %v1064 = vrot.slane %v985, 7
      %v1065 = vshll.u32 %v926, 16
      %v1067 = vor.u32 %v1064, %v1065
      %v1068 = vrot.slane %v989, 7
      %v1069 = vshll.u32 %v927, 16
      %v1071 = vor.u32 %v1068, %v1069
      %vm1088 = vcmask 1040384
      %vm1089 = vsmask.f32 256
      %vm1090 = vmand %vm1088, %vm1089
      %v1091 = vsel %vm1090, %v931, %v1011
      %v1092 = vsel %vm1090, %v935, %v1015
      %v1093 = vsel %vm1090, %v939, %v1019
      %v1094 = vsel %vm1090, %v943, %v1023
      %v1095 = vsel %vm1090, %v947, %v1027
      %v1096 = vsel %vm1090, %v951, %v1031
      %v1097 = vsel %vm1090, %v955, %v1035
      %v1098 = vsel %vm1090, %v959, %v1039
      %v1099 = vsel %vm1090, %v963, %v1043
      %v1100 = vsel %vm1090, %v967, %v1047
      %v1101 = vsel %vm1090, %v971, %v1051
      %v1102 = vsel %vm1090, %v975, %v1055
      %v1103 = vsel %vm1090, %v979, %v1059
      %v1104 = vsel %vm1090, %v983, %v1063
      %v1105 = vsel %vm1090, %v987, %v1067
      %v1106 = vsel %vm1090, %v991, %v1071
      %v1107 = vsel %vm911, 1, 0
      %vm1108 = vcmp.eq.s32.totalorder %v1107, 1
      %vm1109 = vmpackc.low %vm1108, %vm1108
      %v1110 = vsel %vm1109, 65537, 0
      %v1111 = vunpack.c.l.b16 %v1110
      %v1112 = vpack.c.b16 %v1111, %v1111
      %vm1113 = vcmp.ne.s16.totalorder %v1112, 0
      %v1114 = vsel %vm1113, %v1091, 0
      %v1115 = vsel %vm1113, %v1092, 0
      %v1116 = vsel %vm1113, %v1093, 0
      %v1117 = vsel %vm1113, %v1094, 0
      %v1118 = vsel %vm1113, %v1095, 0
      %v1119 = vsel %vm1113, %v1096, 0
      %v1120 = vsel %vm1113, %v1097, 0
      %v1121 = vsel %vm1113, %v1098, 0
      %v1122 = vsel %vm1113, %v1099, 0
      %v1123 = vsel %vm1113, %v1100, 0
      %v1124 = vsel %vm1113, %v1101, 0
      %v1125 = vsel %vm1113, %v1102, 0
      %v1126 = vsel %vm1113, %v1103, 0
      %v1127 = vsel %vm1113, %v1104, 0
      %v1128 = vsel %vm1113, %v1105, 0
      %v1129 = vsel %vm1113, %v1106, 0
      %vm1130 = vcmp.lt.s32.totalorder %v245, 7
      %v1131 = vrot.slane %v1009, 1
      %v1132 = vor.u32 %v929, %v1131
      %v1133 = vrot.slane %v1013, 1
      %v1134 = vor.u32 %v933, %v1133
      %v1135 = vrot.slane %v1017, 1
      %v1136 = vor.u32 %v937, %v1135
      %v1137 = vrot.slane %v1021, 1
      %v1138 = vor.u32 %v941, %v1137
      %v1139 = vrot.slane %v1025, 1
      %v1140 = vor.u32 %v945, %v1139
      %v1141 = vrot.slane %v1029, 1
      %v1142 = vor.u32 %v949, %v1141
      %v1143 = vrot.slane %v1033, 1
      %v1144 = vor.u32 %v953, %v1143
      %v1145 = vrot.slane %v1037, 1
      %v1146 = vor.u32 %v957, %v1145
      %v1147 = vrot.slane %v1041, 1
      %v1148 = vor.u32 %v961, %v1147
      %v1149 = vrot.slane %v1045, 1
      %v1150 = vor.u32 %v965, %v1149
      %v1151 = vrot.slane %v1049, 1
      %v1152 = vor.u32 %v969, %v1151
      %v1153 = vrot.slane %v1053, 1
      %v1154 = vor.u32 %v973, %v1153
      %v1155 = vrot.slane %v1057, 1
      %v1156 = vor.u32 %v977, %v1155
      %v1157 = vrot.slane %v1061, 1
      %v1158 = vor.u32 %v981, %v1157
      %v1159 = vrot.slane %v1065, 1
      %v1160 = vor.u32 %v985, %v1159
      %v1161 = vrot.slane %v1069, 1
      %v1162 = vor.u32 %v989, %v1161
      %v1179 = vrot.slane %v1009, 5
      %v1180 = vrot.slane %v1013, 5
      %v1181 = vrot.slane %v1017, 5
      %v1182 = vrot.slane %v1021, 5
      %v1183 = vrot.slane %v1025, 5
      %v1184 = vrot.slane %v1029, 5
      %v1185 = vrot.slane %v1033, 5
      %v1186 = vrot.slane %v1037, 5
      %v1187 = vrot.slane %v1041, 5
      %v1188 = vrot.slane %v1045, 5
      %v1189 = vrot.slane %v1049, 5
      %v1190 = vrot.slane %v1053, 5
      %v1191 = vrot.slane %v1057, 5
      %v1192 = vrot.slane %v1061, 5
      %v1193 = vrot.slane %v1065, 5
      %v1194 = vrot.slane %v1069, 5
      %vm1211 = vcmask 1043456
      %vm1212 = vsmask.f32 3328
      %vm1213 = vmand %vm1211, %vm1212
      %v1214 = vsel %vm1213, %v1132, %v1179
      %v1215 = vsel %vm1213, %v1134, %v1180
      %v1216 = vsel %vm1213, %v1136, %v1181
      %v1217 = vsel %vm1213, %v1138, %v1182
      %v1218 = vsel %vm1213, %v1140, %v1183
      %v1219 = vsel %vm1213, %v1142, %v1184
      %v1220 = vsel %vm1213, %v1144, %v1185
      %v1221 = vsel %vm1213, %v1146, %v1186
      %v1222 = vsel %vm1213, %v1148, %v1187
      %v1223 = vsel %vm1213, %v1150, %v1188
      %v1224 = vsel %vm1213, %v1152, %v1189
      %v1225 = vsel %vm1213, %v1154, %v1190
      %v1226 = vsel %vm1213, %v1156, %v1191
      %v1227 = vsel %vm1213, %v1158, %v1192
      %v1228 = vsel %vm1213, %v1160, %v1193
      %v1229 = vsel %vm1213, %v1162, %v1194
      %v1230 = vsel %vm1130, 1, 0
      %vm1231 = vcmp.eq.s32.totalorder %v1230, 1
      %vm1232 = vmpackc.low %vm1231, %vm1231
      %v1233 = vsel %vm1232, 65537, 0
      %v1234 = vunpack.c.l.b16 %v1233
      %v1235 = vpack.c.b16 %v1234, %v1234
      %vm1236 = vcmp.ne.s16.totalorder %v1235, 0
      %v1237 = vsel %vm1236, %v1214, 0
      %v1238 = vsel %vm1236, %v1215, 0
      %v1239 = vsel %vm1236, %v1216, 0
      %v1240 = vsel %vm1236, %v1217, 0
      %v1241 = vsel %vm1236, %v1218, 0
      %v1242 = vsel %vm1236, %v1219, 0
      %v1243 = vsel %vm1236, %v1220, 0
      %v1244 = vsel %vm1236, %v1221, 0
      %v1245 = vsel %vm1236, %v1222, 0
      %v1246 = vsel %vm1236, %v1223, 0
      %v1247 = vsel %vm1236, %v1224, 0
      %v1248 = vsel %vm1236, %v1225, 0
      %v1249 = vsel %vm1236, %v1226, 0
      %v1250 = vsel %vm1236, %v1227, 0
      %v1251 = vsel %vm1236, %v1228, 0
      %v1252 = vsel %vm1236, %v1229, 0
      %v1253 = vld [vmem:[%s3] sm:$0xff]
      %v1254 = vld [vmem:[%s3 + $0x8] sm:$0xff]
      %v1255 = vld [vmem:[%s3 + $0x10] sm:$0xff]
      %v1256 = vld [vmem:[%s3 + $0x18] sm:$0xff]
      %v1257 = vld [vmem:[%s3 + $0x20] sm:$0xff]
      %v1258 = vld [vmem:[%s3 + $0x28] sm:$0xff]
      %v1259 = vld [vmem:[%s3 + $0x30] sm:$0xff]
      %v1260 = vld [vmem:[%s3 + $0x38] sm:$0xff]
      %v1261 = vld [vmem:[%s3 + $0x40] sm:$0xff]
      %v1262 = vld [vmem:[%s3 + $0x48] sm:$0xff]
      %v1263 = vld [vmem:[%s3 + $0x50] sm:$0xff]
      %v1264 = vld [vmem:[%s3 + $0x58] sm:$0xff]
      %v1265 = vld [vmem:[%s3 + $0x60] sm:$0xff]
      %v1266 = vld [vmem:[%s3 + $0x68] sm:$0xff]
      %v1267 = vld [vmem:[%s3 + $0x70] sm:$0xff]
      %v1268 = vld [vmem:[%s3 + $0x78] sm:$0xff]
      %v1269 = vld [vmem:[%s3 + $0x80] sm:$0xff]
      %v1270 = vld [vmem:[%s3 + $0x88] sm:$0xff]
      %v1271 = vld [vmem:[%s3 + $0x90] sm:$0xff]
      %v1272 = vld [vmem:[%s3 + $0x98] sm:$0xff]
      %v1273 = vld [vmem:[%s3 + $0xa0] sm:$0xff]
      %v1274 = vld [vmem:[%s3 + $0xa8] sm:$0xff]
      %v1275 = vld [vmem:[%s3 + $0xb0] sm:$0xff]
      %v1276 = vld [vmem:[%s3 + $0xb8] sm:$0xff]
      %v1277 = vld [vmem:[%s3 + $0xc0] sm:$0xff]
      %v1278 = vld [vmem:[%s3 + $0xc8] sm:$0xff]
      %v1279 = vld [vmem:[%s3 + $0xd0] sm:$0xff]
      %v1280 = vld [vmem:[%s3 + $0xd8] sm:$0xff]
      %v1281 = vld [vmem:[%s3 + $0xe0] sm:$0xff]
      %v1282 = vld [vmem:[%s3 + $0xe8] sm:$0xff]
      %v1283 = vld [vmem:[%s3 + $0xf0] sm:$0xff]
      %v1284 = vld [vmem:[%s3 + $0xf8] sm:$0xff]
      %v1301 = vunpack.c.l.b16 %v1114
      %v1302 = vunpack.c.l.b16 %v1115
      %v1303 = vunpack.c.l.b16 %v1116
      %v1304 = vunpack.c.l.b16 %v1117
      %v1305 = vunpack.c.l.b16 %v1118
      %v1306 = vunpack.c.l.b16 %v1119
      %v1307 = vunpack.c.l.b16 %v1120
      %v1308 = vunpack.c.l.b16 %v1121
      %v1309 = vunpack.c.l.b16 %v1122
      %v1310 = vunpack.c.l.b16 %v1123
      %v1311 = vunpack.c.l.b16 %v1124
      %v1312 = vunpack.c.l.b16 %v1125
      %v1313 = vunpack.c.l.b16 %v1126
      %v1314 = vunpack.c.l.b16 %v1127
      %v1315 = vunpack.c.l.b16 %v1128
      %v1316 = vunpack.c.l.b16 %v1129
      %s1317 = scalar_lea.vmem %s3, 256
      %v1318 = vld [vmem:[%s1317] sm:$0xff]
      %v1319 = vld [vmem:[%s1317 + $0x8] sm:$0xff]
      %v1320 = vld [vmem:[%s1317 + $0x10] sm:$0xff]
      %v1321 = vld [vmem:[%s1317 + $0x18] sm:$0xff]
      %v1322 = vld [vmem:[%s1317 + $0x20] sm:$0xff]
      %v1323 = vld [vmem:[%s1317 + $0x28] sm:$0xff]
      %v1324 = vld [vmem:[%s1317 + $0x30] sm:$0xff]
      %v1325 = vld [vmem:[%s1317 + $0x38] sm:$0xff]
      %v1326 = vld [vmem:[%s1317 + $0x40] sm:$0xff]
      %v1327 = vld [vmem:[%s1317 + $0x48] sm:$0xff]
      %v1328 = vld [vmem:[%s1317 + $0x50] sm:$0xff]
      %v1329 = vld [vmem:[%s1317 + $0x58] sm:$0xff]
      %v1330 = vld [vmem:[%s1317 + $0x60] sm:$0xff]
      %v1331 = vld [vmem:[%s1317 + $0x68] sm:$0xff]
      %v1332 = vld [vmem:[%s1317 + $0x70] sm:$0xff]
      %v1333 = vld [vmem:[%s1317 + $0x78] sm:$0xff]
      %v1334 = vld [vmem:[%s1317 + $0x80] sm:$0xff]
      %v1335 = vld [vmem:[%s1317 + $0x88] sm:$0xff]
      %v1336 = vld [vmem:[%s1317 + $0x90] sm:$0xff]
      %v1337 = vld [vmem:[%s1317 + $0x98] sm:$0xff]
      %v1338 = vld [vmem:[%s1317 + $0xa0] sm:$0xff]
      %v1339 = vld [vmem:[%s1317 + $0xa8] sm:$0xff]
      %v1340 = vld [vmem:[%s1317 + $0xb0] sm:$0xff]
      %v1341 = vld [vmem:[%s1317 + $0xb8] sm:$0xff]
      %v1342 = vld [vmem:[%s1317 + $0xc0] sm:$0xff]
      %v1343 = vld [vmem:[%s1317 + $0xc8] sm:$0xff]
      %v1344 = vld [vmem:[%s1317 + $0xd0] sm:$0xff]
      %v1345 = vld [vmem:[%s1317 + $0xd8] sm:$0xff]
      %v1346 = vld [vmem:[%s1317 + $0xe0] sm:$0xff]
      %v1347 = vld [vmem:[%s1317 + $0xe8] sm:$0xff]
      %v1348 = vld [vmem:[%s1317 + $0xf0] sm:$0xff]
      %v1349 = vld [vmem:[%s1317 + $0xf8] sm:$0xff]
      %v1382 = vunpack.c.l.b16 %v1318
      %v1383 = vunpack.c.h.b16 %v1318
      %v1384 = vunpack.c.l.b16 %v1319
      %v1385 = vunpack.c.h.b16 %v1319
      %v1386 = vunpack.c.l.b16 %v1320
      %v1387 = vunpack.c.h.b16 %v1320
      %v1388 = vunpack.c.l.b16 %v1321
      %v1389 = vunpack.c.h.b16 %v1321
      %v1390 = vunpack.c.l.b16 %v1322
      %v1391 = vunpack.c.h.b16 %v1322
      %v1392 = vunpack.c.l.b16 %v1323
      %v1393 = vunpack.c.h.b16 %v1323
      %v1394 = vunpack.c.l.b16 %v1324
      %v1395 = vunpack.c.h.b16 %v1324
      %v1396 = vunpack.c.l.b16 %v1325
      %v1397 = vunpack.c.h.b16 %v1325
      %v1398 = vunpack.c.l.b16 %v1326
      %v1399 = vunpack.c.h.b16 %v1326
      %v1400 = vunpack.c.l.b16 %v1327
      %v1401 = vunpack.c.h.b16 %v1327
      %v1402 = vunpack.c.l.b16 %v1328
      %v1403 = vunpack.c.h.b16 %v1328
      %v1404 = vunpack.c.l.b16 %v1329
      %v1405 = vunpack.c.h.b16 %v1329
      %v1406 = vunpack.c.l.b16 %v1330
      %v1407 = vunpack.c.h.b16 %v1330
      %v1408 = vunpack.c.l.b16 %v1331
      %v1409 = vunpack.c.h.b16 %v1331
      %v1410 = vunpack.c.l.b16 %v1332
      %v1411 = vunpack.c.h.b16 %v1332
      %v1412 = vunpack.c.l.b16 %v1333
      %v1413 = vunpack.c.h.b16 %v1333
      %v1414 = vunpack.c.l.b16 %v1334
      %v1415 = vunpack.c.h.b16 %v1334
      %v1416 = vunpack.c.l.b16 %v1335
      %v1417 = vunpack.c.h.b16 %v1335
      %v1418 = vunpack.c.l.b16 %v1336
      %v1419 = vunpack.c.h.b16 %v1336
      %v1420 = vunpack.c.l.b16 %v1337
      %v1421 = vunpack.c.h.b16 %v1337
      %v1422 = vunpack.c.l.b16 %v1338
      %v1423 = vunpack.c.h.b16 %v1338
      %v1424 = vunpack.c.l.b16 %v1339
      %v1425 = vunpack.c.h.b16 %v1339
      %v1426 = vunpack.c.l.b16 %v1340
      %v1427 = vunpack.c.h.b16 %v1340
      %v1428 = vunpack.c.l.b16 %v1341
      %v1429 = vunpack.c.h.b16 %v1341
      %v1430 = vunpack.c.l.b16 %v1342
      %v1431 = vunpack.c.h.b16 %v1342
      %v1432 = vunpack.c.l.b16 %v1343
      %v1433 = vunpack.c.h.b16 %v1343
      %v1434 = vunpack.c.l.b16 %v1344
      %v1435 = vunpack.c.h.b16 %v1344
      %v1436 = vunpack.c.l.b16 %v1345
      %v1437 = vunpack.c.h.b16 %v1345
      %v1438 = vunpack.c.l.b16 %v1346
      %v1439 = vunpack.c.h.b16 %v1346
      %v1440 = vunpack.c.l.b16 %v1347
      %v1441 = vunpack.c.h.b16 %v1347
      %v1442 = vunpack.c.l.b16 %v1348
      %v1443 = vunpack.c.h.b16 %v1348
      %v1444 = vunpack.c.l.b16 %v1349
      %v1445 = vunpack.c.h.b16 %v1349
      %v1446 = vpack.c.b16 %v1384, %v1382
      %v1447 = vpack.c.b16 %v1385, %v1383
      %v1448 = vpack.c.b16 %v1388, %v1386
      %v1449 = vpack.c.b16 %v1389, %v1387
      %v1450 = vpack.c.b16 %v1392, %v1390
      %v1451 = vpack.c.b16 %v1393, %v1391
      %v1452 = vpack.c.b16 %v1396, %v1394
      %v1453 = vpack.c.b16 %v1397, %v1395
      %v1454 = vpack.c.b16 %v1400, %v1398
      %v1455 = vpack.c.b16 %v1401, %v1399
      %v1456 = vpack.c.b16 %v1404, %v1402
      %v1457 = vpack.c.b16 %v1405, %v1403
      %v1458 = vpack.c.b16 %v1408, %v1406
      %v1459 = vpack.c.b16 %v1409, %v1407
      %v1460 = vpack.c.b16 %v1412, %v1410
      %v1461 = vpack.c.b16 %v1413, %v1411
      %v1462 = vpack.c.b16 %v1416, %v1414
      %v1463 = vpack.c.b16 %v1417, %v1415
      %v1464 = vpack.c.b16 %v1420, %v1418
      %v1465 = vpack.c.b16 %v1421, %v1419
      %v1466 = vpack.c.b16 %v1424, %v1422
      %v1467 = vpack.c.b16 %v1425, %v1423
      %v1468 = vpack.c.b16 %v1428, %v1426
      %v1469 = vpack.c.b16 %v1429, %v1427
      %v1470 = vpack.c.b16 %v1432, %v1430
      %v1471 = vpack.c.b16 %v1433, %v1431
      %v1472 = vpack.c.b16 %v1436, %v1434
      %v1473 = vpack.c.b16 %v1437, %v1435
      %v1474 = vpack.c.b16 %v1440, %v1438
      %v1475 = vpack.c.b16 %v1441, %v1439
      %v1476 = vpack.c.b16 %v1444, %v1442
      %v1477 = vpack.c.b16 %v1445, %v1443
      %1510 = vmatprep.subr.bf16.mxu0 %v1447
      %1511 = vmatpush1.bf16.msra.mxu0 %v1446
      %1512 = vmatprep.subr.bf16.mxu0 %v1449
      %1513 = vmatpush1.bf16.msra.mxu0 %v1448
      %1514 = vmatprep.subr.bf16.mxu0 %v1451
      %1515 = vmatpush1.bf16.msra.mxu0 %v1450
      %1516 = vmatprep.subr.bf16.mxu0 %v1453
      %1517 = vmatpush1.bf16.msra.mxu0 %v1452
      %1518 = vmatprep.subr.bf16.mxu0 %v1455
      %1519 = vmatpush1.bf16.msra.mxu0 %v1454
      %1520 = vmatprep.subr.bf16.mxu0 %v1457
      %1521 = vmatpush1.bf16.msra.mxu0 %v1456
      %1522 = vmatprep.subr.bf16.mxu0 %v1459
      %1523 = vmatpush1.bf16.msra.mxu0 %v1458
      %1524 = vmatprep.subr.bf16.mxu0 %v1461
      %1525 = vmatpush1.bf16.msra.mxu0 %v1460
      %1526 = vmatprep.subr.bf16.mxu0 %v1463
      %1527 = vmatpush1.bf16.msra.mxu0 %v1462
      %1528 = vmatprep.subr.bf16.mxu0 %v1465
      %1529 = vmatpush1.bf16.msra.mxu0 %v1464
      %1530 = vmatprep.subr.bf16.mxu0 %v1467
      %1531 = vmatpush1.bf16.msra.mxu0 %v1466
      %1532 = vmatprep.subr.bf16.mxu0 %v1469
      %1533 = vmatpush1.bf16.msra.mxu0 %v1468
      %1534 = vmatprep.subr.bf16.mxu0 %v1471
      %1535 = vmatpush1.bf16.msra.mxu0 %v1470
      %1536 = vmatprep.subr.bf16.mxu0 %v1473
      %1537 = vmatpush1.bf16.msra.mxu0 %v1472
      %1538 = vmatprep.subr.bf16.mxu0 %v1475
      %1539 = vmatpush1.bf16.msra.mxu0 %v1474
      %1540 = vmatprep.subr.bf16.mxu0 %v1477
      %1541 = vmatpush1.bf16.msra.mxu0 %v1476
      %1542 = vmatprep.mubr.bf16.mxu0 %v880
      %1543 = vmatmul.mubr.bf16.gmra.mrb[0].mxu0 %v879
      %v1544 = vpop.f32.mrb[0].mxu0
      %v1545 = vadd.f32 0.0, %v1544
      %v1546 = vpop.f32.mrb[0].mxu0
      %v1547 = vadd.f32 0.0, %v1546
      %v1548 = vpop.f32.mrb[0].mxu0
      %v1549 = vadd.f32 0.0, %v1548
      %v1550 = vpop.f32.mrb[0].mxu0
      %v1551 = vadd.f32 0.0, %v1550
      %1552 = vmatprep.mubr.bf16.mxu0 %v882
      %1553 = vmatmul.mubr.bf16.gmra.mrb[0].mxu0 %v881
      %v1554 = vpop.f32.mrb[0].mxu0
      %v1555 = vadd.f32 0.0, %v1554
      %v1556 = vpop.f32.mrb[0].mxu0
      %v1557 = vadd.f32 0.0, %v1556
      %v1558 = vpop.f32.mrb[0].mxu0
      %v1559 = vadd.f32 0.0, %v1558
      %v1560 = vpop.f32.mrb[0].mxu0
      %v1561 = vadd.f32 0.0, %v1560
      %1562 = vmatprep.mubr.bf16.mxu0 %v884
      %1563 = vmatmul.mubr.bf16.gmra.mrb[0].mxu0 %v883
      %v1564 = vpop.f32.mrb[0].mxu0
      %v1565 = vadd.f32 0.0, %v1564
      %v1566 = vpop.f32.mrb[0].mxu0
      %v1567 = vadd.f32 0.0, %v1566
      %v1568 = vpop.f32.mrb[0].mxu0
      %v1569 = vadd.f32 0.0, %v1568
      %v1570 = vpop.f32.mrb[0].mxu0
      %v1571 = vadd.f32 0.0, %v1570
      %1572 = vmatprep.mubr.bf16.mxu0 %v886
      %1573 = vmatmul.mubr.bf16.gmra.mrb[0].mxu0 %v885
      %v1574 = vpop.f32.mrb[0].mxu0
      %v1575 = vadd.f32 0.0, %v1574
      %v1576 = vpop.f32.mrb[0].mxu0
      %v1577 = vadd.f32 0.0, %v1576
      %v1578 = vpop.f32.mrb[0].mxu0
      %v1579 = vadd.f32 0.0, %v1578
      %v1580 = vpop.f32.mrb[0].mxu0
      %v1581 = vadd.f32 0.0, %v1580
      %1582 = vdwg.mxu0
      %v1583 = vpack.c.b16 %v1303, %v1301
      %v1584 = vpack.c.b16 %v1304, %v1302
      %v1585 = vpack.c.b16 %v1307, %v1305
      %v1586 = vpack.c.b16 %v1308, %v1306
      %v1587 = vpack.c.b16 %v1311, %v1309
      %v1588 = vpack.c.b16 %v1312, %v1310
      %v1589 = vpack.c.b16 %v1315, %v1313
      %v1590 = vpack.c.b16 %v1316, %v1314
      %v1631 = vunpack.c.l.b16 %v1253
      %v1632 = vunpack.c.h.b16 %v1253
      %v1633 = vunpack.c.l.b16 %v1254
      %v1634 = vunpack.c.h.b16 %v1254
      %v1635 = vunpack.c.l.b16 %v1255
      %v1636 = vunpack.c.h.b16 %v1255
      %v1637 = vunpack.c.l.b16 %v1256
      %v1638 = vunpack.c.h.b16 %v1256
      %v1639 = vunpack.c.l.b16 %v1257
      %v1640 = vunpack.c.h.b16 %v1257
      %v1641 = vunpack.c.l.b16 %v1258
      %v1642 = vunpack.c.h.b16 %v1258
      %v1643 = vunpack.c.l.b16 %v1259
      %v1644 = vunpack.c.h.b16 %v1259
      %v1645 = vunpack.c.l.b16 %v1260
      %v1646 = vunpack.c.h.b16 %v1260
      %v1647 = vunpack.c.l.b16 %v1261
      %v1648 = vunpack.c.h.b16 %v1261
      %v1649 = vunpack.c.l.b16 %v1262
      %v1650 = vunpack.c.h.b16 %v1262
      %v1651 = vunpack.c.l.b16 %v1263
      %v1652 = vunpack.c.h.b16 %v1263
      %v1653 = vunpack.c.l.b16 %v1264
      %v1654 = vunpack.c.h.b16 %v1264
      %v1655 = vunpack.c.l.b16 %v1265
      %v1656 = vunpack.c.h.b16 %v1265
      %v1657 = vunpack.c.l.b16 %v1266
      %v1658 = vunpack.c.h.b16 %v1266
      %v1659 = vunpack.c.l.b16 %v1267
      %v1660 = vunpack.c.h.b16 %v1267
      %v1661 = vunpack.c.l.b16 %v1268
      %v1662 = vunpack.c.h.b16 %v1268
      %v1663 = vunpack.c.l.b16 %v1269
      %v1664 = vunpack.c.h.b16 %v1269
      %v1665 = vunpack.c.l.b16 %v1270
      %v1666 = vunpack.c.h.b16 %v1270
      %v1667 = vunpack.c.l.b16 %v1271
      %v1668 = vunpack.c.h.b16 %v1271
      %v1669 = vunpack.c.l.b16 %v1272
      %v1670 = vunpack.c.h.b16 %v1272
      %v1671 = vunpack.c.l.b16 %v1273
      %v1672 = vunpack.c.h.b16 %v1273
      %v1673 = vunpack.c.l.b16 %v1274
      %v1674 = vunpack.c.h.b16 %v1274
      %v1675 = vunpack.c.l.b16 %v1275
      %v1676 = vunpack.c.h.b16 %v1275
      %v1677 = vunpack.c.l.b16 %v1276
      %v1678 = vunpack.c.h.b16 %v1276
      %v1679 = vunpack.c.l.b16 %v1277
      %v1680 = vunpack.c.h.b16 %v1277
      %v1681 = vunpack.c.l.b16 %v1278
      %v1682 = vunpack.c.h.b16 %v1278
      %v1683 = vunpack.c.l.b16 %v1279
      %v1684 = vunpack.c.h.b16 %v1279
      %v1685 = vunpack.c.l.b16 %v1280
      %v1686 = vunpack.c.h.b16 %v1280
      %v1687 = vunpack.c.l.b16 %v1281
      %v1688 = vunpack.c.h.b16 %v1281
      %v1689 = vunpack.c.l.b16 %v1282
      %v1690 = vunpack.c.h.b16 %v1282
      %v1691 = vunpack.c.l.b16 %v1283
      %v1692 = vunpack.c.h.b16 %v1283
      %v1693 = vunpack.c.l.b16 %v1284
      %v1694 = vunpack.c.h.b16 %v1284
      %v1695 = vpack.c.b16 %v1633, %v1631
      %v1696 = vpack.c.b16 %v1634, %v1632
      %v1697 = vpack.c.b16 %v1637, %v1635
      %v1698 = vpack.c.b16 %v1638, %v1636
      %v1699 = vpack.c.b16 %v1641, %v1639
      %v1700 = vpack.c.b16 %v1642, %v1640
      %v1701 = vpack.c.b16 %v1645, %v1643
      %v1702 = vpack.c.b16 %v1646, %v1644
      %v1703 = vpack.c.b16 %v1649, %v1647
      %v1704 = vpack.c.b16 %v1650, %v1648
      %v1705 = vpack.c.b16 %v1653, %v1651
      %v1706 = vpack.c.b16 %v1654, %v1652
      %v1707 = vpack.c.b16 %v1657, %v1655
      %v1708 = vpack.c.b16 %v1658, %v1656
      %v1709 = vpack.c.b16 %v1661, %v1659
      %v1710 = vpack.c.b16 %v1662, %v1660
      %v1711 = vpack.c.b16 %v1665, %v1663
      %v1712 = vpack.c.b16 %v1666, %v1664
      %v1713 = vpack.c.b16 %v1669, %v1667
      %v1714 = vpack.c.b16 %v1670, %v1668
      %v1715 = vpack.c.b16 %v1673, %v1671
      %v1716 = vpack.c.b16 %v1674, %v1672
      %v1717 = vpack.c.b16 %v1677, %v1675
      %v1718 = vpack.c.b16 %v1678, %v1676
      %v1719 = vpack.c.b16 %v1681, %v1679
      %v1720 = vpack.c.b16 %v1682, %v1680
      %v1721 = vpack.c.b16 %v1685, %v1683
      %v1722 = vpack.c.b16 %v1686, %v1684
      %v1723 = vpack.c.b16 %v1689, %v1687
      %v1724 = vpack.c.b16 %v1690, %v1688
      %v1725 = vpack.c.b16 %v1693, %v1691
      %v1726 = vpack.c.b16 %v1694, %v1692
      %1759 = vmatprep.subr.bf16.mxu0 %v1696
      %1760 = vmatpush1.bf16.msra.mxu0 %v1695
      %1761 = vmatprep.subr.bf16.mxu0 %v1698
      %1762 = vmatpush1.bf16.msra.mxu0 %v1697
      %1763 = vmatprep.subr.bf16.mxu0 %v1700
      %1764 = vmatpush1.bf16.msra.mxu0 %v1699
      %1765 = vmatprep.subr.bf16.mxu0 %v1702
      %1766 = vmatpush1.bf16.msra.mxu0 %v1701
      %1767 = vmatprep.subr.bf16.mxu0 %v1704
      %1768 = vmatpush1.bf16.msra.mxu0 %v1703
      %1769 = vmatprep.subr.bf16.mxu0 %v1706
      %1770 = vmatpush1.bf16.msra.mxu0 %v1705
      %1771 = vmatprep.subr.bf16.mxu0 %v1708
      %1772 = vmatpush1.bf16.msra.mxu0 %v1707
      %1773 = vmatprep.subr.bf16.mxu0 %v1710
      %1774 = vmatpush1.bf16.msra.mxu0 %v1709
      %1775 = vmatprep.subr.bf16.mxu0 %v1712
      %1776 = vmatpush1.bf16.msra.mxu0 %v1711
      %1777 = vmatprep.subr.bf16.mxu0 %v1714
      %1778 = vmatpush1.bf16.msra.mxu0 %v1713
      %1779 = vmatprep.subr.bf16.mxu0 %v1716
      %1780 = vmatpush1.bf16.msra.mxu0 %v1715
      %1781 = vmatprep.subr.bf16.mxu0 %v1718
      %1782 = vmatpush1.bf16.msra.mxu0 %v1717
      %1783 = vmatprep.subr.bf16.mxu0 %v1720
      %1784 = vmatpush1.bf16.msra.mxu0 %v1719
      %1785 = vmatprep.subr.bf16.mxu0 %v1722
      %1786 = vmatpush1.bf16.msra.mxu0 %v1721
      %1787 = vmatprep.subr.bf16.mxu0 %v1724
      %1788 = vmatpush1.bf16.msra.mxu0 %v1723
      %1789 = vmatprep.subr.bf16.mxu0 %v1726
      %1790 = vmatpush1.bf16.msra.mxu0 %v1725
      %1791 = vmatprep.mubr.bf16.mxu0 %v1584
      %1792 = vmatmul.mubr.bf16.gmra.mrb[0].mxu0 %v1583
      %v1793 = vpop.f32.mrb[0].mxu0
      %v1794 = vadd.f32 %v1545, %v1793
      %v1795 = vpop.f32.mrb[0].mxu0
      %v1796 = vadd.f32 %v1547, %v1795
      %v1797 = vpop.f32.mrb[0].mxu0
      %v1798 = vadd.f32 %v1549, %v1797
      %v1799 = vpop.f32.mrb[0].mxu0
      %v1800 = vadd.f32 %v1551, %v1799
      %1801 = vmatprep.mubr.bf16.mxu0 %v1586
      %1802 = vmatmul.mubr.bf16.gmra.mrb[0].mxu0 %v1585
      %v1803 = vpop.f32.mrb[0].mxu0
      %v1804 = vadd.f32 %v1555, %v1803
      %v1805 = vpop.f32.mrb[0].mxu0
      %v1806 = vadd.f32 %v1557, %v1805
      %v1807 = vpop.f32.mrb[0].mxu0
      %v1808 = vadd.f32 %v1559, %v1807
      %v1809 = vpop.f32.mrb[0].mxu0
      %v1810 = vadd.f32 %v1561, %v1809
      %1811 = vmatprep.mubr.bf16.mxu0 %v1588
      %1812 = vmatmul.mubr.bf16.gmra.mrb[0].mxu0 %v1587
      %v1813 = vpop.f32.mrb[0].mxu0
      %v1814 = vadd.f32 %v1565, %v1813
      %v1815 = vpop.f32.mrb[0].mxu0
      %v1816 = vadd.f32 %v1567, %v1815
      %v1817 = vpop.f32.mrb[0].mxu0
      %v1818 = vadd.f32 %v1569, %v1817
      %v1819 = vpop.f32.mrb[0].mxu0
      %v1820 = vadd.f32 %v1571, %v1819
      %1821 = vmatprep.mubr.bf16.mxu0 %v1590
      %1822 = vmatmul.mubr.bf16.gmra.mrb[0].mxu0 %v1589
      %v1823 = vpop.f32.mrb[0].mxu0
      %v1824 = vadd.f32 %v1575, %v1823
      %v1825 = vpop.f32.mrb[0].mxu0
      %v1826 = vadd.f32 %v1577, %v1825
      %v1827 = vpop.f32.mrb[0].mxu0
      %v1828 = vadd.f32 %v1579, %v1827
      %v1829 = vpop.f32.mrb[0].mxu0
      %v1830 = vadd.f32 %v1581, %v1829
      %1831 = vdwg.mxu0
      %s1832 = scalar_lea.vmem %s3, 512
      %v1833 = vld [vmem:[%s1832] sm:$0xff]
      %v1834 = vld [vmem:[%s1832 + $0x8] sm:$0xff]
      %v1835 = vld [vmem:[%s1832 + $0x10] sm:$0xff]
      %v1836 = vld [vmem:[%s1832 + $0x18] sm:$0xff]
      %v1837 = vld [vmem:[%s1832 + $0x20] sm:$0xff]
      %v1838 = vld [vmem:[%s1832 + $0x28] sm:$0xff]
      %v1839 = vld [vmem:[%s1832 + $0x30] sm:$0xff]
      %v1840 = vld [vmem:[%s1832 + $0x38] sm:$0xff]
      %v1841 = vld [vmem:[%s1832 + $0x40] sm:$0xff]
      %v1842 = vld [vmem:[%s1832 + $0x48] sm:$0xff]
      %v1843 = vld [vmem:[%s1832 + $0x50] sm:$0xff]
      %v1844 = vld [vmem:[%s1832 + $0x58] sm:$0xff]
      %v1845 = vld [vmem:[%s1832 + $0x60] sm:$0xff]
      %v1846 = vld [vmem:[%s1832 + $0x68] sm:$0xff]
      %v1847 = vld [vmem:[%s1832 + $0x70] sm:$0xff]
      %v1848 = vld [vmem:[%s1832 + $0x78] sm:$0xff]
      %v1849 = vld [vmem:[%s1832 + $0x80] sm:$0xff]
      %v1850 = vld [vmem:[%s1832 + $0x88] sm:$0xff]
      %v1851 = vld [vmem:[%s1832 + $0x90] sm:$0xff]
      %v1852 = vld [vmem:[%s1832 + $0x98] sm:$0xff]
      %v1853 = vld [vmem:[%s1832 + $0xa0] sm:$0xff]
      %v1854 = vld [vmem:[%s1832 + $0xa8] sm:$0xff]
      %v1855 = vld [vmem:[%s1832 + $0xb0] sm:$0xff]
      %v1856 = vld [vmem:[%s1832 + $0xb8] sm:$0xff]
      %v1857 = vld [vmem:[%s1832 + $0xc0] sm:$0xff]
      %v1858 = vld [vmem:[%s1832 + $0xc8] sm:$0xff]
      %v1859 = vld [vmem:[%s1832 + $0xd0] sm:$0xff]
      %v1860 = vld [vmem:[%s1832 + $0xd8] sm:$0xff]
      %v1861 = vld [vmem:[%s1832 + $0xe0] sm:$0xff]
      %v1862 = vld [vmem:[%s1832 + $0xe8] sm:$0xff]
      %v1863 = vld [vmem:[%s1832 + $0xf0] sm:$0xff]
      %v1864 = vld [vmem:[%s1832 + $0xf8] sm:$0xff]
      %v1881 = vunpack.c.l.b16 %v1237
      %v1882 = vunpack.c.l.b16 %v1238
      %v1883 = vunpack.c.l.b16 %v1239
      %v1884 = vunpack.c.l.b16 %v1240
      %v1885 = vunpack.c.l.b16 %v1241
      %v1886 = vunpack.c.l.b16 %v1242
      %v1887 = vunpack.c.l.b16 %v1243
      %v1888 = vunpack.c.l.b16 %v1244
      %v1889 = vunpack.c.l.b16 %v1245
      %v1890 = vunpack.c.l.b16 %v1246
      %v1891 = vunpack.c.l.b16 %v1247
      %v1892 = vunpack.c.l.b16 %v1248
      %v1893 = vunpack.c.l.b16 %v1249
      %v1894 = vunpack.c.l.b16 %v1250
      %v1895 = vunpack.c.l.b16 %v1251
      %v1896 = vunpack.c.l.b16 %v1252
      %v1897 = vpack.c.b16 %v1883, %v1881
      %v1898 = vpack.c.b16 %v1884, %v1882
      %v1899 = vpack.c.b16 %v1887, %v1885
      %v1900 = vpack.c.b16 %v1888, %v1886
      %v1901 = vpack.c.b16 %v1891, %v1889
      %v1902 = vpack.c.b16 %v1892, %v1890
      %v1903 = vpack.c.b16 %v1895, %v1893
      %v1904 = vpack.c.b16 %v1896, %v1894
      %v1945 = vunpack.c.l.b16 %v1833
      %v1946 = vunpack.c.h.b16 %v1833
      %v1947 = vunpack.c.l.b16 %v1834
      %v1948 = vunpack.c.h.b16 %v1834
      %v1949 = vunpack.c.l.b16 %v1835
      %v1950 = vunpack.c.h.b16 %v1835
      %v1951 = vunpack.c.l.b16 %v1836
      %v1952 = vunpack.c.h.b16 %v1836
      %v1953 = vunpack.c.l.b16 %v1837
      %v1954 = vunpack.c.h.b16 %v1837
      %v1955 = vunpack.c.l.b16 %v1838
      %v1956 = vunpack.c.h.b16 %v1838
      %v1957 = vunpack.c.l.b16 %v1839
      %v1958 = vunpack.c.h.b16 %v1839
      %v1959 = vunpack.c.l.b16 %v1840
      %v1960 = vunpack.c.h.b16 %v1840
      %v1961 = vunpack.c.l.b16 %v1841
      %v1962 = vunpack.c.h.b16 %v1841
      %v1963 = vunpack.c.l.b16 %v1842
      %v1964 = vunpack.c.h.b16 %v1842
      %v1965 = vunpack.c.l.b16 %v1843
      %v1966 = vunpack.c.h.b16 %v1843
      %v1967 = vunpack.c.l.b16 %v1844
      %v1968 = vunpack.c.h.b16 %v1844
      %v1969 = vunpack.c.l.b16 %v1845
      %v1970 = vunpack.c.h.b16 %v1845
      %v1971 = vunpack.c.l.b16 %v1846
      %v1972 = vunpack.c.h.b16 %v1846
      %v1973 = vunpack.c.l.b16 %v1847
      %v1974 = vunpack.c.h.b16 %v1847
      %v1975 = vunpack.c.l.b16 %v1848
      %v1976 = vunpack.c.h.b16 %v1848
      %v1977 = vunpack.c.l.b16 %v1849
      %v1978 = vunpack.c.h.b16 %v1849
      %v1979 = vunpack.c.l.b16 %v1850
      %v1980 = vunpack.c.h.b16 %v1850
      %v1981 = vunpack.c.l.b16 %v1851
      %v1982 = vunpack.c.h.b16 %v1851
      %v1983 = vunpack.c.l.b16 %v1852
      %v1984 = vunpack.c.h.b16 %v1852
      %v1985 = vunpack.c.l.b16 %v1853
      %v1986 = vunpack.c.h.b16 %v1853
      %v1987 = vunpack.c.l.b16 %v1854
      %v1988 = vunpack.c.h.b16 %v1854
      %v1989 = vunpack.c.l.b16 %v1855
      %v1990 = vunpack.c.h.b16 %v1855
      %v1991 = vunpack.c.l.b16 %v1856
      %v1992 = vunpack.c.h.b16 %v1856
      %v1993 = vunpack.c.l.b16 %v1857
      %v1994 = vunpack.c.h.b16 %v1857
      %v1995 = vunpack.c.l.b16 %v1858
      %v1996 = vunpack.c.h.b16 %v1858
      %v1997 = vunpack.c.l.b16 %v1859
      %v1998 = vunpack.c.h.b16 %v1859
      %v1999 = vunpack.c.l.b16 %v1860
      %v2000 = vunpack.c.h.b16 %v1860
      %v2001 = vunpack.c.l.b16 %v1861
      %v2002 = vunpack.c.h.b16 %v1861
      %v2003 = vunpack.c.l.b16 %v1862
      %v2004 = vunpack.c.h.b16 %v1862
      %v2005 = vunpack.c.l.b16 %v1863
      %v2006 = vunpack.c.h.b16 %v1863
      %v2007 = vunpack.c.l.b16 %v1864
      %v2008 = vunpack.c.h.b16 %v1864
      %v2009 = vpack.c.b16 %v1947, %v1945
      %v2010 = vpack.c.b16 %v1948, %v1946
      %v2011 = vpack.c.b16 %v1951, %v1949
      %v2012 = vpack.c.b16 %v1952, %v1950
      %v2013 = vpack.c.b16 %v1955, %v1953
      %v2014 = vpack.c.b16 %v1956, %v1954
      %v2015 = vpack.c.b16 %v1959, %v1957
      %v2016 = vpack.c.b16 %v1960, %v1958
      %v2017 = vpack.c.b16 %v1963, %v1961
      %v2018 = vpack.c.b16 %v1964, %v1962
      %v2019 = vpack.c.b16 %v1967, %v1965
      %v2020 = vpack.c.b16 %v1968, %v1966
      %v2021 = vpack.c.b16 %v1971, %v1969
      %v2022 = vpack.c.b16 %v1972, %v1970
      %v2023 = vpack.c.b16 %v1975, %v1973
      %v2024 = vpack.c.b16 %v1976, %v1974
      %v2025 = vpack.c.b16 %v1979, %v1977
      %v2026 = vpack.c.b16 %v1980, %v1978
      %v2027 = vpack.c.b16 %v1983, %v1981
      %v2028 = vpack.c.b16 %v1984, %v1982
      %v2029 = vpack.c.b16 %v1987, %v1985
      %v2030 = vpack.c.b16 %v1988, %v1986
      %v2031 = vpack.c.b16 %v1991, %v1989
      %v2032 = vpack.c.b16 %v1992, %v1990
      %v2033 = vpack.c.b16 %v1995, %v1993
      %v2034 = vpack.c.b16 %v1996, %v1994
      %v2035 = vpack.c.b16 %v1999, %v1997
      %v2036 = vpack.c.b16 %v2000, %v1998
      %v2037 = vpack.c.b16 %v2003, %v2001
      %v2038 = vpack.c.b16 %v2004, %v2002
      %v2039 = vpack.c.b16 %v2007, %v2005
      %v2040 = vpack.c.b16 %v2008, %v2006
      %2073 = vmatprep.subr.bf16.mxu0 %v2010
      %2074 = vmatpush1.bf16.msra.mxu0 %v2009
      %2075 = vmatprep.subr.bf16.mxu0 %v2012
      %2076 = vmatpush1.bf16.msra.mxu0 %v2011
      %2077 = vmatprep.subr.bf16.mxu0 %v2014
      %2078 = vmatpush1.bf16.msra.mxu0 %v2013
      %2079 = vmatprep.subr.bf16.mxu0 %v2016
      %2080 = vmatpush1.bf16.msra.mxu0 %v2015
      %2081 = vmatprep.subr.bf16.mxu0 %v2018
      %2082 = vmatpush1.bf16.msra.mxu0 %v2017
      %2083 = vmatprep.subr.bf16.mxu0 %v2020
      %2084 = vmatpush1.bf16.msra.mxu0 %v2019
      %2085 = vmatprep.subr.bf16.mxu0 %v2022
      %2086 = vmatpush1.bf16.msra.mxu0 %v2021
      %2087 = vmatprep.subr.bf16.mxu0 %v2024
      %2088 = vmatpush1.bf16.msra.mxu0 %v2023
      %2089 = vmatprep.subr.bf16.mxu0 %v2026
      %2090 = vmatpush1.bf16.msra.mxu0 %v2025
      %2091 = vmatprep.subr.bf16.mxu0 %v2028
      %2092 = vmatpush1.bf16.msra.mxu0 %v2027
      %2093 = vmatprep.subr.bf16.mxu0 %v2030
      %2094 = vmatpush1.bf16.msra.mxu0 %v2029
      %2095 = vmatprep.subr.bf16.mxu0 %v2032
      %2096 = vmatpush1.bf16.msra.mxu0 %v2031
      %2097 = vmatprep.subr.bf16.mxu0 %v2034
      %2098 = vmatpush1.bf16.msra.mxu0 %v2033
      %2099 = vmatprep.subr.bf16.mxu0 %v2036
      %2100 = vmatpush1.bf16.msra.mxu0 %v2035
      %2101 = vmatprep.subr.bf16.mxu0 %v2038
      %2102 = vmatpush1.bf16.msra.mxu0 %v2037
      %2103 = vmatprep.subr.bf16.mxu0 %v2040
      %2104 = vmatpush1.bf16.msra.mxu0 %v2039
      %2105 = vmatprep.mubr.bf16.mxu0 %v1898
      %2106 = vmatmul.mubr.bf16.gmra.mrb[0].mxu0 %v1897
      %v2107 = vpop.f32.mrb[0].mxu0
      %v2108 = vadd.f32 0.0, %v2107
      %v2109 = vpop.f32.mrb[0].mxu0
      %v2110 = vadd.f32 0.0, %v2109
      %v2111 = vpop.f32.mrb[0].mxu0
      %v2112 = vadd.f32 0.0, %v2111
      %v2113 = vpop.f32.mrb[0].mxu0
      %v2114 = vadd.f32 0.0, %v2113
      %2115 = vmatprep.mubr.bf16.mxu0 %v1900
      %2116 = vmatmul.mubr.bf16.gmra.mrb[0].mxu0 %v1899
      %v2117 = vpop.f32.mrb[0].mxu0
      %v2118 = vadd.f32 0.0, %v2117
      %v2119 = vpop.f32.mrb[0].mxu0
      %v2120 = vadd.f32 0.0, %v2119
      %v2121 = vpop.f32.mrb[0].mxu0
      %v2122 = vadd.f32 0.0, %v2121
      %v2123 = vpop.f32.mrb[0].mxu0
      %v2124 = vadd.f32 0.0, %v2123
      %2125 = vmatprep.mubr.bf16.mxu0 %v1902
      %2126 = vmatmul.mubr.bf16.gmra.mrb[0].mxu0 %v1901
      %v2127 = vpop.f32.mrb[0].mxu0
      %v2128 = vadd.f32 0.0, %v2127
      %v2129 = vpop.f32.mrb[0].mxu0
      %v2130 = vadd.f32 0.0, %v2129
      %v2131 = vpop.f32.mrb[0].mxu0
      %v2132 = vadd.f32 0.0, %v2131
      %v2133 = vpop.f32.mrb[0].mxu0
      %v2134 = vadd.f32 0.0, %v2133
      %2135 = vmatprep.mubr.bf16.mxu0 %v1904
      %2136 = vmatmul.mubr.bf16.gmra.mrb[0].mxu0 %v1903
      %v2137 = vpop.f32.mrb[0].mxu0
      %v2138 = vadd.f32 0.0, %v2137
      %v2139 = vpop.f32.mrb[0].mxu0
      %v2140 = vadd.f32 0.0, %v2139
      %v2141 = vpop.f32.mrb[0].mxu0
      %v2142 = vadd.f32 0.0, %v2141
      %v2143 = vpop.f32.mrb[0].mxu0
      %v2144 = vadd.f32 0.0, %v2143
      %2145 = vdwg.mxu0
      %v2146 = vadd.f32 %v1794, %v2108
      %v2147 = vadd.f32 %v1796, %v2110
      %v2148 = vadd.f32 %v1798, %v2112
      %v2149 = vadd.f32 %v1800, %v2114
      %v2150 = vadd.f32 %v1804, %v2118
      %v2151 = vadd.f32 %v1806, %v2120
      %v2152 = vadd.f32 %v1808, %v2122
      %v2153 = vadd.f32 %v1810, %v2124
      %v2154 = vadd.f32 %v1814, %v2128
      %v2155 = vadd.f32 %v1816, %v2130
      %v2156 = vadd.f32 %v1818, %v2132
      %v2157 = vadd.f32 %v1820, %v2134
      %v2158 = vadd.f32 %v1824, %v2138
      %v2159 = vadd.f32 %v1826, %v2140
      %v2160 = vadd.f32 %v1828, %v2142
      %v2161 = vadd.f32 %v1830, %v2144
      %v2162 = vld [vmem:[%s4] sm:$0x3]
      %v2164 = vlaneseq
      %v2165 = vshrl.u32 %v2164, 7
      %v2166 = vsub.s32 0, %v2165
      %v2167 = vrot.slane %v2162, %v2166
      %v2168 = vlaneseq
      %v2169 = vshrl.u32 %v2168, 7
      %v2170 = vsub.s32 1, %v2169
      %v2171 = vrot.slane %v2162, %v2170
      %v2174 = vadd.f32 %v2146, %v2167
      %v2175 = vadd.f32 %v2147, %v2171
      %v2176 = vadd.f32 %v2148, %v2167
      %v2177 = vadd.f32 %v2149, %v2171
      %v2178 = vadd.f32 %v2150, %v2167
      %v2179 = vadd.f32 %v2151, %v2171
      %v2180 = vadd.f32 %v2152, %v2167
      %v2181 = vadd.f32 %v2153, %v2171
      %v2182 = vadd.f32 %v2154, %v2167
      %v2183 = vadd.f32 %v2155, %v2171
      %v2184 = vadd.f32 %v2156, %v2167
      %v2185 = vadd.f32 %v2157, %v2171
      %v2186 = vadd.f32 %v2158, %v2167
      %v2187 = vadd.f32 %v2159, %v2171
      %v2188 = vadd.f32 %v2160, %v2167
      %v2189 = vadd.f32 %v2161, %v2171
      %v2190 = vmax.f32 %v2174, 0.0
      %v2191 = vmax.f32 %v2175, 0.0
      %v2192 = vmax.f32 %v2176, 0.0
      %v2193 = vmax.f32 %v2177, 0.0
      %v2194 = vmax.f32 %v2178, 0.0
      %v2195 = vmax.f32 %v2179, 0.0
      %v2196 = vmax.f32 %v2180, 0.0
      %v2197 = vmax.f32 %v2181, 0.0
      %v2198 = vmax.f32 %v2182, 0.0
      %v2199 = vmax.f32 %v2183, 0.0
      %v2200 = vmax.f32 %v2184, 0.0
      %v2201 = vmax.f32 %v2185, 0.0
      %v2202 = vmax.f32 %v2186, 0.0
      %v2203 = vmax.f32 %v2187, 0.0
      %v2204 = vmax.f32 %v2188, 0.0
      %v2205 = vmax.f32 %v2189, 0.0
      %2206 = vst [vmem:[%s224] sm:$0xff] %v2190
      %2207 = vst [vmem:[%s224 + $0x8] sm:$0xff] %v2191
      %2208 = vst [vmem:[%s224 + $0x10] sm:$0xff] %v2192
      %2209 = vst [vmem:[%s224 + $0x18] sm:$0xff] %v2193
      %2210 = vst [vmem:[%s224 + $0x20] sm:$0xff] %v2194
      %2211 = vst [vmem:[%s224 + $0x28] sm:$0xff] %v2195
      %2212 = vst [vmem:[%s224 + $0x30] sm:$0xff] %v2196
      %2213 = vst [vmem:[%s224 + $0x38] sm:$0xff] %v2197
      %2214 = vst [vmem:[%s224 + $0x40] sm:$0xff] %v2198
      %2215 = vst [vmem:[%s224 + $0x48] sm:$0xff] %v2199
      %2216 = vst [vmem:[%s224 + $0x50] sm:$0xff] %v2200
      %2217 = vst [vmem:[%s224 + $0x58] sm:$0xff] %v2201
      %2218 = vst [vmem:[%s224 + $0x60] sm:$0xff] %v2202
      %2219 = vst [vmem:[%s224 + $0x68] sm:$0xff] %v2203
      %2220 = vst [vmem:[%s224 + $0x70] sm:$0xff] %v2204
      %2221 = vst [vmem:[%s224 + $0x78] sm:$0xff] %v2205
      %p2222 = scmp.lt.s32.totalorder %s16, 1
      %s2223 = scalar_select %p2222, %s16, 1
      %s2224 = smul.addr %s2223, 16
      %s2225 = smul.addr %s2224, 8
      %s2226 = scalar_lea.vmem %s5, %s2225
      // Predicated region
      $region41: #{conv2plus1d_forward.1} parent=39 // pred_check
        %p2227 = pneg %p144
      $region42: #{conv2plus1d_forward.1} parent=39 // pred_check_branch
        %2229 = sbr.rel (%p2227) target = $region44
      $region43: #{conv2plus1d_forward.1} parent=39 // pred_region
        _
      $region44: #{conv2plus1d_forward.1} parent=39 // pred_fallthru
        _
    $region40: #{conv2plus1d_forward.1} parent=5 // pred_fallthru
      _
    %p2230 = scmp.le.s32.totalorder 2, %s11
    // Predicated region
    $region45: #{conv2plus1d_forward.1} parent=5 // pred_check
      %p2231 = pneg %p2230
    $region46: #{conv2plus1d_forward.1} parent=5 // pred_check_branch
      %2233 = sbr.rel (%p2231) target = $region48
    $region47: #{conv2plus1d_forward.1} parent=5 // pred_region
      %s2234 = ssub.s32 %s11, 2
      // Predicated region
      $region49: #{conv2plus1d_forward.1} parent=47 // pred_check
        %p2235 = pneg %p150
      $region50: #{conv2plus1d_forward.1} parent=47 // pred_check_branch
        %2237 = sbr.rel (%p2235) target = $region52
      $region51: #{conv2plus1d_forward.1} parent=47 // pred_region
        %p2238 = scmp.lt.s32.totalorder %s17, 1
        %s2239 = scalar_select %p2238, %s17, 1
        %s2240 = smul.addr %s2239, 16
        %s2241 = smul.addr %s2240, 8
        %s2242 = scalar_lea.vmem %s5, %s2241
      $region52: #{conv2plus1d_forward.1} parent=47 // pred_fallthru
        _
    $region48: #{conv2plus1d_forward.1} parent=5 // pred_fallthru
      _
  $region6: #{conv2plus1d_forward.1} parent=0 // loop_footer
    %s15 = sadd.s32 1, %s11
  $region7: #{conv2plus1d_forward.1} parent=0 // loop_footer_branch
    %10 = sbr.rel target = $region3
  $region8: #{conv2plus1d_forward.1} parent=0 // loop_exit
    _

</llo_original>
